<compile_context>
chip_gen: v5e
topology: v5e:2x2
jax: 0.10.0
libtpu: 0.0.40
codegen_flags: <defaults>
</compile_context>

<pallas_src>
import jax
import jax.numpy as jnp
import numpy as np
from jax.experimental import pallas as pl
from jax.experimental.pallas import tpu as pltpu


def _gather_rows_T(idx_row, tbl_T):
    """Exact embedding gather, feature-major.

    idx_row: (1, TB) int32 row indices (batch on lanes).
    tbl_T:   (K, R) float32 transposed embedding table (VMEM resident).
    returns  (K, TB) where column t is tbl[idx[t], :].

    Implemented as an unrolled one-hot select over the (small) table rows:
    only 2-D VPU ops, bit-exact (sum of a single nonzero + zeros).
    For realistic table sizes this should become a scalar-prefetch / DMA row
    gather instead.
    """
    k, rows = tbl_T.shape
    tb = idx_row.shape[1]
    acc = jnp.zeros((k, tb), jnp.float32)
    for r in range(rows):
        acc = acc + jnp.where(idx_row == r, tbl_T[:, r:r + 1], 0.0)
    return acc


def _ncf_fused_kernel(xT_ref, utblT_ref, itblT_ref, w1uT_ref, w1vT_ref,
                      b1_ref, w2T_ref, b2_ref, w3_ref,
                      out_ref, uT_out_ref, iT_out_ref):
    # xT_ref: (2, TB) int32 -- row 0 = user index, row 1 = item index.
    idx = xT_ref[...]
    u_idx = idx[0:1, :]                                   # (1, TB)
    i_idx = idx[1:2, :]                                   # (1, TB)

    uT = _gather_rows_T(u_idx, utblT_ref[...])            # (K, TB)
    iT = _gather_rows_T(i_idx, itblT_ref[...])            # (K, TB)
    uT_out_ref[...] = uT                                  # lane-dense store
    iT_out_ref[...] = iT                                  # lane-dense store

    # h1 = relu(W1u @ u + W1v @ i + b1)  -- concat removed via weight split.
    h1 = jnp.dot(w1uT_ref[...], uT, preferred_element_type=jnp.float32)
    h1 = h1 + jnp.dot(w1vT_ref[...], iT, preferred_element_type=jnp.float32)
    h1 = jnp.maximum(h1 + b1_ref[...], 0.0)               # (K, TB)

    h2 = jnp.dot(w2T_ref[...], h1, preferred_element_type=jnp.float32)
    h2 = jnp.maximum(h2 + b2_ref[...], 0.0)               # (K2, TB)

    # Final (K2 -> 1) layer on the VPU/XLU; result stays lane-dense (1, TB).
    out_row = jnp.sum(h2 * w3_ref[...], axis=0, keepdims=True)
    out_ref[...] = out_row[None, :, :]                    # (1, 1, TB)


def ncf_forward(x_idx, params, *, block_b=128):
    """Fused NCF forward. Returns (out (B,1), user_embed (B,K), item_embed (B,K))."""
    user_tbl = params["user_embedding"]                   # (U, K)
    item_tbl = params["item_embedding"]                   # (I, K)
    w1, b1 = params["w1"], params["b1"]                   # (2K, K), (K,)
    w2, b2 = params["w2"], params["b2"]                   # (K, K2), (K2,)
    w3 = params["w3"]                                     # (K2, 1)

    n_users, K = user_tbl.shape
    n_items = item_tbl.shape[0]
    K2 = w2.shape[1]
    B = x_idx.shape[0]

    nb = pl.cdiv(B, block_b)
    b_pad = nb * block_b

    # Pad the batch to whole lane-dense tiles; padded rows use index 0 and are
    # sliced away below.  Indices are passed transposed (batch on lanes).
    xT = jnp.zeros((2, b_pad), jnp.int32).at[:, :B].set(
        x_idx.astype(jnp.int32).T)

    # Feature-major ("transposed") operands so the batch lives on lanes.
    utblT = user_tbl.T                                    # (K, U)
    itblT = item_tbl.T                                    # (K, I)
    w1uT = w1[:K, :].T                                    # (K, K)   user half
    w1vT = w1[K:, :].T                                    # (K, K)   item half
    b1c = b1.reshape(K, 1)
    w2T = w2.T                                            # (K2, K)
    b2c = b2.reshape(K2, 1)
    w3c = w3.reshape(K2, 1)

    flops = 2 * b_pad * (2 * K * K + K * K2 + K2) + b_pad * (n_users + n_items) * K
    bytes_accessed = 4 * (xT.size + utblT.size + itblT.size
                          + 2 * K * K + K + K * K2 + K2 + K2
                          + b_pad * (2 * K + 1))
    wconst = lambda b: (0, 0)

    out_slab, uT_pad, iT_pad = pl.pallas_call(
        _ncf_fused_kernel,
        out_shape=(
            jax.ShapeDtypeStruct((nb, 1, block_b), jnp.float32),   # out slab
            jax.ShapeDtypeStruct((K, b_pad), jnp.float32),         # user emb^T
            jax.ShapeDtypeStruct((K, b_pad), jnp.float32),         # item emb^T
        ),
        grid=(nb,),
        in_specs=[
            pl.BlockSpec((2, block_b), lambda b: (0, b)),   # indices
            pl.BlockSpec((K, n_users), wconst),             # user table (resident)
            pl.BlockSpec((K, n_items), wconst),             # item table (resident)
            pl.BlockSpec((K, K), wconst),                   # W1 (user half)
            pl.BlockSpec((K, K), wconst),                   # W1 (item half)
            pl.BlockSpec((K, 1), wconst),                   # b1
            pl.BlockSpec((K2, K), wconst),                  # W2
            pl.BlockSpec((K2, 1), wconst),                  # b2
            pl.BlockSpec((K2, 1), wconst),                  # w3
        ],
        out_specs=(
            pl.BlockSpec((1, 1, block_b), lambda b: (b, 0, 0)),
            pl.BlockSpec((K, block_b), lambda b: (0, b)),
            pl.BlockSpec((K, block_b), lambda b: (0, b)),
        ),
        compiler_params=pltpu.CompilerParams(
            dimension_semantics=("parallel",)),
        cost_estimate=pl.CostEstimate(
            flops=int(flops), transcendentals=0,
            bytes_accessed=int(bytes_accessed)),
    )(xT, utblT, itblT, w1uT, w1vT, b1c, w2T, b2c, w3c)

    out = out_slab.reshape(b_pad, 1)[:B]
    user_embed = uT_pad.T[:B]
    item_embed = iT_pad.T[:B]
    return out, user_embed, item_embed


def ncf_reference(x_idx, params):
    """Pure-JAX reference for correctness checking."""
    u = jnp.take(params["user_embedding"], x_idx[:, 0], axis=0)
    i = jnp.take(params["item_embedding"], x_idx[:, 1], axis=0)
    z = jnp.concatenate([u, i], axis=1)
    h1 = jnp.maximum(z @ params["w1"] + params["b1"], 0.0)
    h2 = jnp.maximum(h1 @ params["w2"] + params["b2"], 0.0)
    out = h2 @ params["w3"]
    return out, u, i


if __name__ == "__main__":
    # Small, deterministic configuration; batch deliberately not a multiple of
    # the 128-wide tile so padding + multi-block grid are exercised.
    num_users = 20
    num_items = 24
    embedding_k = 32
    batch = 200

    key = jax.random.PRNGKey(0)
    keys = jax.random.split(key, 8)

    params = {
        # nn.Embedding default: N(0, 1)
        "user_embedding": jax.random.normal(
            keys[0], (num_users, embedding_k), jnp.float32),
        "item_embedding": jax.random.normal(
            keys[1], (num_items, embedding_k), jnp.float32),
        # nn.Linear weights stored pre-transposed as (in, out); biases 1-D.
        "w1": jax.random.uniform(
            keys[2], (embedding_k * 2, embedding_k), jnp.float32,
            minval=-0.1, maxval=0.1),
        "b1": jax.random.uniform(
            keys[3], (embedding_k,), jnp.float32, minval=-0.1, maxval=0.1),
        "w2": jax.random.uniform(
            keys[4], (embedding_k, embedding_k // 2), jnp.float32,
            minval=-0.1, maxval=0.1),
        "b2": jax.random.uniform(
            keys[5], (embedding_k // 2,), jnp.float32,
            minval=-0.1, maxval=0.1),
        "w3": jax.random.uniform(
            keys[6], (embedding_k // 2, 1), jnp.float32,
            minval=-0.1, maxval=0.1),
    }

    # x: (batch, 2) int32 -> column 0 = user index, column 1 = item index.
    user_idx = jax.random.randint(keys[7], (batch,), 0, num_users, jnp.int32)
    item_idx = jax.random.randint(
        jax.random.fold_in(keys[7], 1), (batch,), 0, num_items, jnp.int32)
    x = jnp.stack([user_idx, item_idx], axis=1)

    out, user_embed, item_embed = ncf_forward(x, params)
    jax.block_until_ready((out, user_embed, item_embed))

    out_ref, u_ref, i_ref = ncf_reference(x, params)
    np.testing.assert_allclose(np.asarray(out), np.asarray(out_ref),
                               rtol=1e-5, atol=1e-5)
    np.testing.assert_allclose(np.asarray(user_embed), np.asarray(u_ref),
                               rtol=1e-6, atol=1e-6)
    np.testing.assert_allclose(np.asarray(item_embed), np.asarray(i_ref),
                               rtol=1e-6, atol=1e-6)

    print("KERNEL_OK")
</pallas_src>

<mosaic_0001>
module attributes {stable_mosaic.version = 11 : i64} {
  func.func @_ncf_fused_kernel(%arg0: i32, %arg1: memref<2x128xi32, #tpu.memory_space<vmem>>, %arg2: memref<32x20xf32, #tpu.memory_space<vmem>>, %arg3: memref<32x24xf32, #tpu.memory_space<vmem>>, %arg4: memref<32x32xf32, #tpu.memory_space<vmem>>, %arg5: memref<32x32xf32, #tpu.memory_space<vmem>>, %arg6: memref<32x1xf32, #tpu.memory_space<vmem>>, %arg7: memref<16x32xf32, #tpu.memory_space<vmem>>, %arg8: memref<16x1xf32, #tpu.memory_space<vmem>>, %arg9: memref<16x1xf32, #tpu.memory_space<vmem>>, %arg10: memref<1x1x128xf32, #tpu.memory_space<vmem>>, %arg11: memref<32x128xf32, #tpu.memory_space<vmem>>, %arg12: memref<32x128xf32, #tpu.memory_space<vmem>>) attributes {dimension_semantics = [#tpu.dimension_semantics<parallel>], iteration_bounds = array<i64: 2>, scalar_prefetch = 0 : i64, scratch_operands = 0 : i64, tpu.core_type = #tpu.core_type<tc>, window_params = [{transform_indices = @transform_0, window_bounds = array<i64: 2, 128>}, {pipeline_mode = #tpu.pipeline_mode<synchronous>, transform_indices = @transform_1, window_bounds = array<i64: 32, 20>}, {pipeline_mode = #tpu.pipeline_mode<synchronous>, transform_indices = @transform_2, window_bounds = array<i64: 32, 24>}, {pipeline_mode = #tpu.pipeline_mode<synchronous>, transform_indices = @transform_3, window_bounds = array<i64: 32, 32>}, {pipeline_mode = #tpu.pipeline_mode<synchronous>, transform_indices = @transform_4, window_bounds = array<i64: 32, 32>}, {pipeline_mode = #tpu.pipeline_mode<synchronous>, transform_indices = @transform_5, window_bounds = array<i64: 32, 1>}, {pipeline_mode = #tpu.pipeline_mode<synchronous>, transform_indices = @transform_6, window_bounds = array<i64: 16, 32>}, {pipeline_mode = #tpu.pipeline_mode<synchronous>, transform_indices = @transform_7, window_bounds = array<i64: 16, 1>}, {pipeline_mode = #tpu.pipeline_mode<synchronous>, transform_indices = @transform_8, window_bounds = array<i64: 16, 1>}, {transform_indices = @transform_9, window_bounds = array<i64: 1, 1, 128>}, {transform_indices = @transform_10, window_bounds = array<i64: 32, 128>}, {transform_indices = @transform_11, window_bounds = array<i64: 32, 128>}]} {
    %c0 = arith.constant 0 : index
    %c0_0 = arith.constant 0 : index
    %0 = vector.load %arg1[%c0, %c0_0] : memref<2x128xi32, #tpu.memory_space<vmem>>, vector<2x128xi32>
    %1 = vector.extract_strided_slice %0 {offsets = [0, 0], sizes = [1, 128], strides = [1, 1]} : vector<2x128xi32> to vector<1x128xi32>
    %2 = vector.extract_strided_slice %0 {offsets = [1, 0], sizes = [1, 128], strides = [1, 1]} : vector<2x128xi32> to vector<1x128xi32>
    %c0_1 = arith.constant 0 : index
    %c0_2 = arith.constant 0 : index
    %3 = vector.load %arg2[%c0_1, %c0_2] : memref<32x20xf32, #tpu.memory_space<vmem>>, vector<32x20xf32>
    %cst = arith.constant 0.000000e+00 : f32
    %4 = vector.broadcast %cst : f32 to vector<32x128xf32>
    %c0_i32 = arith.constant 0 : i32
    %5 = vector.broadcast %c0_i32 : i32 to vector<1x128xi32>
    %6 = arith.cmpi eq, %1, %5 : vector<1x128xi32>
    %7 = vector.extract_strided_slice %3 {offsets = [0, 0], sizes = [32, 1], strides = [1, 1]} : vector<32x20xf32> to vector<32x1xf32>
    %cst_3 = arith.constant 0.000000e+00 : f32
    %8 = vector.shape_cast %6 : vector<1x128xi1> to vector<1x128xi1>
    %9 = vector.broadcast %8 : vector<1x128xi1> to vector<32x128xi1>
    %10 = vector.shape_cast %7 : vector<32x1xf32> to vector<32x1xf32>
    %11 = vector.broadcast %10 : vector<32x1xf32> to vector<32x128xf32>
    %12 = vector.broadcast %cst_3 : f32 to vector<32x128xf32>
    %13 = arith.select %9, %11, %12 : vector<32x128xi1>, vector<32x128xf32>
    %14 = arith.addf %4, %13 : vector<32x128xf32>
    %c1_i32 = arith.constant 1 : i32
    %15 = vector.broadcast %c1_i32 : i32 to vector<1x128xi32>
    %16 = arith.cmpi eq, %1, %15 : vector<1x128xi32>
    %17 = vector.extract_strided_slice %3 {offsets = [0, 1], sizes = [32, 1], strides = [1, 1]} : vector<32x20xf32> to vector<32x1xf32>
    %cst_4 = arith.constant 0.000000e+00 : f32
    %18 = vector.shape_cast %16 : vector<1x128xi1> to vector<1x128xi1>
    %19 = vector.broadcast %18 : vector<1x128xi1> to vector<32x128xi1>
    %20 = vector.shape_cast %17 : vector<32x1xf32> to vector<32x1xf32>
    %21 = vector.broadcast %20 : vector<32x1xf32> to vector<32x128xf32>
    %22 = vector.broadcast %cst_4 : f32 to vector<32x128xf32>
    %23 = arith.select %19, %21, %22 : vector<32x128xi1>, vector<32x128xf32>
    %24 = arith.addf %14, %23 : vector<32x128xf32>
    %c2_i32 = arith.constant 2 : i32
    %25 = vector.broadcast %c2_i32 : i32 to vector<1x128xi32>
    %26 = arith.cmpi eq, %1, %25 : vector<1x128xi32>
    %27 = vector.extract_strided_slice %3 {offsets = [0, 2], sizes = [32, 1], strides = [1, 1]} : vector<32x20xf32> to vector<32x1xf32>
    %cst_5 = arith.constant 0.000000e+00 : f32
    %28 = vector.shape_cast %26 : vector<1x128xi1> to vector<1x128xi1>
    %29 = vector.broadcast %28 : vector<1x128xi1> to vector<32x128xi1>
    %30 = vector.shape_cast %27 : vector<32x1xf32> to vector<32x1xf32>
    %31 = vector.broadcast %30 : vector<32x1xf32> to vector<32x128xf32>
    %32 = vector.broadcast %cst_5 : f32 to vector<32x128xf32>
    %33 = arith.select %29, %31, %32 : vector<32x128xi1>, vector<32x128xf32>
    %34 = arith.addf %24, %33 : vector<32x128xf32>
    %c3_i32 = arith.constant 3 : i32
    %35 = vector.broadcast %c3_i32 : i32 to vector<1x128xi32>
    %36 = arith.cmpi eq, %1, %35 : vector<1x128xi32>
    %37 = vector.extract_strided_slice %3 {offsets = [0, 3], sizes = [32, 1], strides = [1, 1]} : vector<32x20xf32> to vector<32x1xf32>
    %cst_6 = arith.constant 0.000000e+00 : f32
    %38 = vector.shape_cast %36 : vector<1x128xi1> to vector<1x128xi1>
    %39 = vector.broadcast %38 : vector<1x128xi1> to vector<32x128xi1>
    %40 = vector.shape_cast %37 : vector<32x1xf32> to vector<32x1xf32>
    %41 = vector.broadcast %40 : vector<32x1xf32> to vector<32x128xf32>
    %42 = vector.broadcast %cst_6 : f32 to vector<32x128xf32>
    %43 = arith.select %39, %41, %42 : vector<32x128xi1>, vector<32x128xf32>
    %44 = arith.addf %34, %43 : vector<32x128xf32>
    %c4_i32 = arith.constant 4 : i32
    %45 = vector.broadcast %c4_i32 : i32 to vector<1x128xi32>
    %46 = arith.cmpi eq, %1, %45 : vector<1x128xi32>
    %47 = vector.extract_strided_slice %3 {offsets = [0, 4], sizes = [32, 1], strides = [1, 1]} : vector<32x20xf32> to vector<32x1xf32>
    %cst_7 = arith.constant 0.000000e+00 : f32
    %48 = vector.shape_cast %46 : vector<1x128xi1> to vector<1x128xi1>
    %49 = vector.broadcast %48 : vector<1x128xi1> to vector<32x128xi1>
    %50 = vector.shape_cast %47 : vector<32x1xf32> to vector<32x1xf32>
    %51 = vector.broadcast %50 : vector<32x1xf32> to vector<32x128xf32>
    %52 = vector.broadcast %cst_7 : f32 to vector<32x128xf32>
    %53 = arith.select %49, %51, %52 : vector<32x128xi1>, vector<32x128xf32>
    %54 = arith.addf %44, %53 : vector<32x128xf32>
    %c5_i32 = arith.constant 5 : i32
    %55 = vector.broadcast %c5_i32 : i32 to vector<1x128xi32>
    %56 = arith.cmpi eq, %1, %55 : vector<1x128xi32>
    %57 = vector.extract_strided_slice %3 {offsets = [0, 5], sizes = [32, 1], strides = [1, 1]} : vector<32x20xf32> to vector<32x1xf32>
    %cst_8 = arith.constant 0.000000e+00 : f32
    %58 = vector.shape_cast %56 : vector<1x128xi1> to vector<1x128xi1>
    %59 = vector.broadcast %58 : vector<1x128xi1> to vector<32x128xi1>
    %60 = vector.shape_cast %57 : vector<32x1xf32> to vector<32x1xf32>
    %61 = vector.broadcast %60 : vector<32x1xf32> to vector<32x128xf32>
    %62 = vector.broadcast %cst_8 : f32 to vector<32x128xf32>
    %63 = arith.select %59, %61, %62 : vector<32x128xi1>, vector<32x128xf32>
    %64 = arith.addf %54, %63 : vector<32x128xf32>
    %c6_i32 = arith.constant 6 : i32
    %65 = vector.broadcast %c6_i32 : i32 to vector<1x128xi32>
    %66 = arith.cmpi eq, %1, %65 : vector<1x128xi32>
    %67 = vector.extract_strided_slice %3 {offsets = [0, 6], sizes = [32, 1], strides = [1, 1]} : vector<32x20xf32> to vector<32x1xf32>
    %cst_9 = arith.constant 0.000000e+00 : f32
    %68 = vector.shape_cast %66 : vector<1x128xi1> to vector<1x128xi1>
    %69 = vector.broadcast %68 : vector<1x128xi1> to vector<32x128xi1>
    %70 = vector.shape_cast %67 : vector<32x1xf32> to vector<32x1xf32>
    %71 = vector.broadcast %70 : vector<32x1xf32> to vector<32x128xf32>
    %72 = vector.broadcast %cst_9 : f32 to vector<32x128xf32>
    %73 = arith.select %69, %71, %72 : vector<32x128xi1>, vector<32x128xf32>
    %74 = arith.addf %64, %73 : vector<32x128xf32>
    %c7_i32 = arith.constant 7 : i32
    %75 = vector.broadcast %c7_i32 : i32 to vector<1x128xi32>
    %76 = arith.cmpi eq, %1, %75 : vector<1x128xi32>
    %77 = vector.extract_strided_slice %3 {offsets = [0, 7], sizes = [32, 1], strides = [1, 1]} : vector<32x20xf32> to vector<32x1xf32>
    %cst_10 = arith.constant 0.000000e+00 : f32
    %78 = vector.shape_cast %76 : vector<1x128xi1> to vector<1x128xi1>
    %79 = vector.broadcast %78 : vector<1x128xi1> to vector<32x128xi1>
    %80 = vector.shape_cast %77 : vector<32x1xf32> to vector<32x1xf32>
    %81 = vector.broadcast %80 : vector<32x1xf32> to vector<32x128xf32>
    %82 = vector.broadcast %cst_10 : f32 to vector<32x128xf32>
    %83 = arith.select %79, %81, %82 : vector<32x128xi1>, vector<32x128xf32>
    %84 = arith.addf %74, %83 : vector<32x128xf32>
    %c8_i32 = arith.constant 8 : i32
    %85 = vector.broadcast %c8_i32 : i32 to vector<1x128xi32>
    %86 = arith.cmpi eq, %1, %85 : vector<1x128xi32>
    %87 = vector.extract_strided_slice %3 {offsets = [0, 8], sizes = [32, 1], strides = [1, 1]} : vector<32x20xf32> to vector<32x1xf32>
    %cst_11 = arith.constant 0.000000e+00 : f32
    %88 = vector.shape_cast %86 : vector<1x128xi1> to vector<1x128xi1>
    %89 = vector.broadcast %88 : vector<1x128xi1> to vector<32x128xi1>
    %90 = vector.shape_cast %87 : vector<32x1xf32> to vector<32x1xf32>
    %91 = vector.broadcast %90 : vector<32x1xf32> to vector<32x128xf32>
    %92 = vector.broadcast %cst_11 : f32 to vector<32x128xf32>
    %93 = arith.select %89, %91, %92 : vector<32x128xi1>, vector<32x128xf32>
    %94 = arith.addf %84, %93 : vector<32x128xf32>
    %c9_i32 = arith.constant 9 : i32
    %95 = vector.broadcast %c9_i32 : i32 to vector<1x128xi32>
    %96 = arith.cmpi eq, %1, %95 : vector<1x128xi32>
    %97 = vector.extract_strided_slice %3 {offsets = [0, 9], sizes = [32, 1], strides = [1, 1]} : vector<32x20xf32> to vector<32x1xf32>
    %cst_12 = arith.constant 0.000000e+00 : f32
    %98 = vector.shape_cast %96 : vector<1x128xi1> to vector<1x128xi1>
    %99 = vector.broadcast %98 : vector<1x128xi1> to vector<32x128xi1>
    %100 = vector.shape_cast %97 : vector<32x1xf32> to vector<32x1xf32>
    %101 = vector.broadcast %100 : vector<32x1xf32> to vector<32x128xf32>
    %102 = vector.broadcast %cst_12 : f32 to vector<32x128xf32>
    %103 = arith.select %99, %101, %102 : vector<32x128xi1>, vector<32x128xf32>
    %104 = arith.addf %94, %103 : vector<32x128xf32>
    %c10_i32 = arith.constant 10 : i32
    %105 = vector.broadcast %c10_i32 : i32 to vector<1x128xi32>
    %106 = arith.cmpi eq, %1, %105 : vector<1x128xi32>
    %107 = vector.extract_strided_slice %3 {offsets = [0, 10], sizes = [32, 1], strides = [1, 1]} : vector<32x20xf32> to vector<32x1xf32>
    %cst_13 = arith.constant 0.000000e+00 : f32
    %108 = vector.shape_cast %106 : vector<1x128xi1> to vector<1x128xi1>
    %109 = vector.broadcast %108 : vector<1x128xi1> to vector<32x128xi1>
    %110 = vector.shape_cast %107 : vector<32x1xf32> to vector<32x1xf32>
    %111 = vector.broadcast %110 : vector<32x1xf32> to vector<32x128xf32>
    %112 = vector.broadcast %cst_13 : f32 to vector<32x128xf32>
    %113 = arith.select %109, %111, %112 : vector<32x128xi1>, vector<32x128xf32>
    %114 = arith.addf %104, %113 : vector<32x128xf32>
    %c11_i32 = arith.constant 11 : i32
    %115 = vector.broadcast %c11_i32 : i32 to vector<1x128xi32>
    %116 = arith.cmpi eq, %1, %115 : vector<1x128xi32>
    %117 = vector.extract_strided_slice %3 {offsets = [0, 11], sizes = [32, 1], strides = [1, 1]} : vector<32x20xf32> to vector<32x1xf32>
    %cst_14 = arith.constant 0.000000e+00 : f32
    %118 = vector.shape_cast %116 : vector<1x128xi1> to vector<1x128xi1>
    %119 = vector.broadcast %118 : vector<1x128xi1> to vector<32x128xi1>
    %120 = vector.shape_cast %117 : vector<32x1xf32> to vector<32x1xf32>
    %121 = vector.broadcast %120 : vector<32x1xf32> to vector<32x128xf32>
    %122 = vector.broadcast %cst_14 : f32 to vector<32x128xf32>
    %123 = arith.select %119, %121, %122 : vector<32x128xi1>, vector<32x128xf32>
    %124 = arith.addf %114, %123 : vector<32x128xf32>
    %c12_i32 = arith.constant 12 : i32
    %125 = vector.broadcast %c12_i32 : i32 to vector<1x128xi32>
    %126 = arith.cmpi eq, %1, %125 : vector<1x128xi32>
    %127 = vector.extract_strided_slice %3 {offsets = [0, 12], sizes = [32, 1], strides = [1, 1]} : vector<32x20xf32> to vector<32x1xf32>
    %cst_15 = arith.constant 0.000000e+00 : f32
    %128 = vector.shape_cast %126 : vector<1x128xi1> to vector<1x128xi1>
    %129 = vector.broadcast %128 : vector<1x128xi1> to vector<32x128xi1>
    %130 = vector.shape_cast %127 : vector<32x1xf32> to vector<32x1xf32>
    %131 = vector.broadcast %130 : vector<32x1xf32> to vector<32x128xf32>
    %132 = vector.broadcast %cst_15 : f32 to vector<32x128xf32>
    %133 = arith.select %129, %131, %132 : vector<32x128xi1>, vector<32x128xf32>
    %134 = arith.addf %124, %133 : vector<32x128xf32>
    %c13_i32 = arith.constant 13 : i32
    %135 = vector.broadcast %c13_i32 : i32 to vector<1x128xi32>
    %136 = arith.cmpi eq, %1, %135 : vector<1x128xi32>
    %137 = vector.extract_strided_slice %3 {offsets = [0, 13], sizes = [32, 1], strides = [1, 1]} : vector<32x20xf32> to vector<32x1xf32>
    %cst_16 = arith.constant 0.000000e+00 : f32
    %138 = vector.shape_cast %136 : vector<1x128xi1> to vector<1x128xi1>
    %139 = vector.broadcast %138 : vector<1x128xi1> to vector<32x128xi1>
    %140 = vector.shape_cast %137 : vector<32x1xf32> to vector<32x1xf32>
    %141 = vector.broadcast %140 : vector<32x1xf32> to vector<32x128xf32>
    %142 = vector.broadcast %cst_16 : f32 to vector<32x128xf32>
    %143 = arith.select %139, %141, %142 : vector<32x128xi1>, vector<32x128xf32>
    %144 = arith.addf %134, %143 : vector<32x128xf32>
    %c14_i32 = arith.constant 14 : i32
    %145 = vector.broadcast %c14_i32 : i32 to vector<1x128xi32>
    %146 = arith.cmpi eq, %1, %145 : vector<1x128xi32>
    %147 = vector.extract_strided_slice %3 {offsets = [0, 14], sizes = [32, 1], strides = [1, 1]} : vector<32x20xf32> to vector<32x1xf32>
    %cst_17 = arith.constant 0.000000e+00 : f32
    %148 = vector.shape_cast %146 : vector<1x128xi1> to vector<1x128xi1>
    %149 = vector.broadcast %148 : vector<1x128xi1> to vector<32x128xi1>
    %150 = vector.shape_cast %147 : vector<32x1xf32> to vector<32x1xf32>
    %151 = vector.broadcast %150 : vector<32x1xf32> to vector<32x128xf32>
    %152 = vector.broadcast %cst_17 : f32 to vector<32x128xf32>
    %153 = arith.select %149, %151, %152 : vector<32x128xi1>, vector<32x128xf32>
    %154 = arith.addf %144, %153 : vector<32x128xf32>
    %c15_i32 = arith.constant 15 : i32
    %155 = vector.broadcast %c15_i32 : i32 to vector<1x128xi32>
    %156 = arith.cmpi eq, %1, %155 : vector<1x128xi32>
    %157 = vector.extract_strided_slice %3 {offsets = [0, 15], sizes = [32, 1], strides = [1, 1]} : vector<32x20xf32> to vector<32x1xf32>
    %cst_18 = arith.constant 0.000000e+00 : f32
    %158 = vector.shape_cast %156 : vector<1x128xi1> to vector<1x128xi1>
    %159 = vector.broadcast %158 : vector<1x128xi1> to vector<32x128xi1>
    %160 = vector.shape_cast %157 : vector<32x1xf32> to vector<32x1xf32>
    %161 = vector.broadcast %160 : vector<32x1xf32> to vector<32x128xf32>
    %162 = vector.broadcast %cst_18 : f32 to vector<32x128xf32>
    %163 = arith.select %159, %161, %162 : vector<32x128xi1>, vector<32x128xf32>
    %164 = arith.addf %154, %163 : vector<32x128xf32>
    %c16_i32 = arith.constant 16 : i32
    %165 = vector.broadcast %c16_i32 : i32 to vector<1x128xi32>
    %166 = arith.cmpi eq, %1, %165 : vector<1x128xi32>
    %167 = vector.extract_strided_slice %3 {offsets = [0, 16], sizes = [32, 1], strides = [1, 1]} : vector<32x20xf32> to vector<32x1xf32>
    %cst_19 = arith.constant 0.000000e+00 : f32
    %168 = vector.shape_cast %166 : vector<1x128xi1> to vector<1x128xi1>
    %169 = vector.broadcast %168 : vector<1x128xi1> to vector<32x128xi1>
    %170 = vector.shape_cast %167 : vector<32x1xf32> to vector<32x1xf32>
    %171 = vector.broadcast %170 : vector<32x1xf32> to vector<32x128xf32>
    %172 = vector.broadcast %cst_19 : f32 to vector<32x128xf32>
    %173 = arith.select %169, %171, %172 : vector<32x128xi1>, vector<32x128xf32>
    %174 = arith.addf %164, %173 : vector<32x128xf32>
    %c17_i32 = arith.constant 17 : i32
    %175 = vector.broadcast %c17_i32 : i32 to vector<1x128xi32>
    %176 = arith.cmpi eq, %1, %175 : vector<1x128xi32>
    %177 = vector.extract_strided_slice %3 {offsets = [0, 17], sizes = [32, 1], strides = [1, 1]} : vector<32x20xf32> to vector<32x1xf32>
    %cst_20 = arith.constant 0.000000e+00 : f32
    %178 = vector.shape_cast %176 : vector<1x128xi1> to vector<1x128xi1>
    %179 = vector.broadcast %178 : vector<1x128xi1> to vector<32x128xi1>
    %180 = vector.shape_cast %177 : vector<32x1xf32> to vector<32x1xf32>
    %181 = vector.broadcast %180 : vector<32x1xf32> to vector<32x128xf32>
    %182 = vector.broadcast %cst_20 : f32 to vector<32x128xf32>
    %183 = arith.select %179, %181, %182 : vector<32x128xi1>, vector<32x128xf32>
    %184 = arith.addf %174, %183 : vector<32x128xf32>
    %c18_i32 = arith.constant 18 : i32
    %185 = vector.broadcast %c18_i32 : i32 to vector<1x128xi32>
    %186 = arith.cmpi eq, %1, %185 : vector<1x128xi32>
    %187 = vector.extract_strided_slice %3 {offsets = [0, 18], sizes = [32, 1], strides = [1, 1]} : vector<32x20xf32> to vector<32x1xf32>
    %cst_21 = arith.constant 0.000000e+00 : f32
    %188 = vector.shape_cast %186 : vector<1x128xi1> to vector<1x128xi1>
    %189 = vector.broadcast %188 : vector<1x128xi1> to vector<32x128xi1>
    %190 = vector.shape_cast %187 : vector<32x1xf32> to vector<32x1xf32>
    %191 = vector.broadcast %190 : vector<32x1xf32> to vector<32x128xf32>
    %192 = vector.broadcast %cst_21 : f32 to vector<32x128xf32>
    %193 = arith.select %189, %191, %192 : vector<32x128xi1>, vector<32x128xf32>
    %194 = arith.addf %184, %193 : vector<32x128xf32>
    %c19_i32 = arith.constant 19 : i32
    %195 = vector.broadcast %c19_i32 : i32 to vector<1x128xi32>
    %196 = arith.cmpi eq, %1, %195 : vector<1x128xi32>
    %197 = vector.extract_strided_slice %3 {offsets = [0, 19], sizes = [32, 1], strides = [1, 1]} : vector<32x20xf32> to vector<32x1xf32>
    %cst_22 = arith.constant 0.000000e+00 : f32
    %198 = vector.shape_cast %196 : vector<1x128xi1> to vector<1x128xi1>
    %199 = vector.broadcast %198 : vector<1x128xi1> to vector<32x128xi1>
    %200 = vector.shape_cast %197 : vector<32x1xf32> to vector<32x1xf32>
    %201 = vector.broadcast %200 : vector<32x1xf32> to vector<32x128xf32>
    %202 = vector.broadcast %cst_22 : f32 to vector<32x128xf32>
    %203 = arith.select %199, %201, %202 : vector<32x128xi1>, vector<32x128xf32>
    %204 = arith.addf %194, %203 : vector<32x128xf32>
    %c0_23 = arith.constant 0 : index
    %c0_24 = arith.constant 0 : index
    %205 = vector.load %arg3[%c0_23, %c0_24] : memref<32x24xf32, #tpu.memory_space<vmem>>, vector<32x24xf32>
    %cst_25 = arith.constant 0.000000e+00 : f32
    %206 = vector.broadcast %cst_25 : f32 to vector<32x128xf32>
    %c0_i32_26 = arith.constant 0 : i32
    %207 = vector.broadcast %c0_i32_26 : i32 to vector<1x128xi32>
    %208 = arith.cmpi eq, %2, %207 : vector<1x128xi32>
    %209 = vector.extract_strided_slice %205 {offsets = [0, 0], sizes = [32, 1], strides = [1, 1]} : vector<32x24xf32> to vector<32x1xf32>
    %cst_27 = arith.constant 0.000000e+00 : f32
    %210 = vector.shape_cast %208 : vector<1x128xi1> to vector<1x128xi1>
    %211 = vector.broadcast %210 : vector<1x128xi1> to vector<32x128xi1>
    %212 = vector.shape_cast %209 : vector<32x1xf32> to vector<32x1xf32>
    %213 = vector.broadcast %212 : vector<32x1xf32> to vector<32x128xf32>
    %214 = vector.broadcast %cst_27 : f32 to vector<32x128xf32>
    %215 = arith.select %211, %213, %214 : vector<32x128xi1>, vector<32x128xf32>
    %216 = arith.addf %206, %215 : vector<32x128xf32>
    %c1_i32_28 = arith.constant 1 : i32
    %217 = vector.broadcast %c1_i32_28 : i32 to vector<1x128xi32>
    %218 = arith.cmpi eq, %2, %217 : vector<1x128xi32>
    %219 = vector.extract_strided_slice %205 {offsets = [0, 1], sizes = [32, 1], strides = [1, 1]} : vector<32x24xf32> to vector<32x1xf32>
    %cst_29 = arith.constant 0.000000e+00 : f32
    %220 = vector.shape_cast %218 : vector<1x128xi1> to vector<1x128xi1>
    %221 = vector.broadcast %220 : vector<1x128xi1> to vector<32x128xi1>
    %222 = vector.shape_cast %219 : vector<32x1xf32> to vector<32x1xf32>
    %223 = vector.broadcast %222 : vector<32x1xf32> to vector<32x128xf32>
    %224 = vector.broadcast %cst_29 : f32 to vector<32x128xf32>
    %225 = arith.select %221, %223, %224 : vector<32x128xi1>, vector<32x128xf32>
    %226 = arith.addf %216, %225 : vector<32x128xf32>
    %c2_i32_30 = arith.constant 2 : i32
    %227 = vector.broadcast %c2_i32_30 : i32 to vector<1x128xi32>
    %228 = arith.cmpi eq, %2, %227 : vector<1x128xi32>
    %229 = vector.extract_strided_slice %205 {offsets = [0, 2], sizes = [32, 1], strides = [1, 1]} : vector<32x24xf32> to vector<32x1xf32>
    %cst_31 = arith.constant 0.000000e+00 : f32
    %230 = vector.shape_cast %228 : vector<1x128xi1> to vector<1x128xi1>
    %231 = vector.broadcast %230 : vector<1x128xi1> to vector<32x128xi1>
    %232 = vector.shape_cast %229 : vector<32x1xf32> to vector<32x1xf32>
    %233 = vector.broadcast %232 : vector<32x1xf32> to vector<32x128xf32>
    %234 = vector.broadcast %cst_31 : f32 to vector<32x128xf32>
    %235 = arith.select %231, %233, %234 : vector<32x128xi1>, vector<32x128xf32>
    %236 = arith.addf %226, %235 : vector<32x128xf32>
    %c3_i32_32 = arith.constant 3 : i32
    %237 = vector.broadcast %c3_i32_32 : i32 to vector<1x128xi32>
    %238 = arith.cmpi eq, %2, %237 : vector<1x128xi32>
    %239 = vector.extract_strided_slice %205 {offsets = [0, 3], sizes = [32, 1], strides = [1, 1]} : vector<32x24xf32> to vector<32x1xf32>
    %cst_33 = arith.constant 0.000000e+00 : f32
    %240 = vector.shape_cast %238 : vector<1x128xi1> to vector<1x128xi1>
    %241 = vector.broadcast %240 : vector<1x128xi1> to vector<32x128xi1>
    %242 = vector.shape_cast %239 : vector<32x1xf32> to vector<32x1xf32>
    %243 = vector.broadcast %242 : vector<32x1xf32> to vector<32x128xf32>
    %244 = vector.broadcast %cst_33 : f32 to vector<32x128xf32>
    %245 = arith.select %241, %243, %244 : vector<32x128xi1>, vector<32x128xf32>
    %246 = arith.addf %236, %245 : vector<32x128xf32>
    %c4_i32_34 = arith.constant 4 : i32
    %247 = vector.broadcast %c4_i32_34 : i32 to vector<1x128xi32>
    %248 = arith.cmpi eq, %2, %247 : vector<1x128xi32>
    %249 = vector.extract_strided_slice %205 {offsets = [0, 4], sizes = [32, 1], strides = [1, 1]} : vector<32x24xf32> to vector<32x1xf32>
    %cst_35 = arith.constant 0.000000e+00 : f32
    %250 = vector.shape_cast %248 : vector<1x128xi1> to vector<1x128xi1>
    %251 = vector.broadcast %250 : vector<1x128xi1> to vector<32x128xi1>
    %252 = vector.shape_cast %249 : vector<32x1xf32> to vector<32x1xf32>
    %253 = vector.broadcast %252 : vector<32x1xf32> to vector<32x128xf32>
    %254 = vector.broadcast %cst_35 : f32 to vector<32x128xf32>
    %255 = arith.select %251, %253, %254 : vector<32x128xi1>, vector<32x128xf32>
    %256 = arith.addf %246, %255 : vector<32x128xf32>
    %c5_i32_36 = arith.constant 5 : i32
    %257 = vector.broadcast %c5_i32_36 : i32 to vector<1x128xi32>
    %258 = arith.cmpi eq, %2, %257 : vector<1x128xi32>
    %259 = vector.extract_strided_slice %205 {offsets = [0, 5], sizes = [32, 1], strides = [1, 1]} : vector<32x24xf32> to vector<32x1xf32>
    %cst_37 = arith.constant 0.000000e+00 : f32
    %260 = vector.shape_cast %258 : vector<1x128xi1> to vector<1x128xi1>
    %261 = vector.broadcast %260 : vector<1x128xi1> to vector<32x128xi1>
    %262 = vector.shape_cast %259 : vector<32x1xf32> to vector<32x1xf32>
    %263 = vector.broadcast %262 : vector<32x1xf32> to vector<32x128xf32>
    %264 = vector.broadcast %cst_37 : f32 to vector<32x128xf32>
    %265 = arith.select %261, %263, %264 : vector<32x128xi1>, vector<32x128xf32>
    %266 = arith.addf %256, %265 : vector<32x128xf32>
    %c6_i32_38 = arith.constant 6 : i32
    %267 = vector.broadcast %c6_i32_38 : i32 to vector<1x128xi32>
    %268 = arith.cmpi eq, %2, %267 : vector<1x128xi32>
    %269 = vector.extract_strided_slice %205 {offsets = [0, 6], sizes = [32, 1], strides = [1, 1]} : vector<32x24xf32> to vector<32x1xf32>
    %cst_39 = arith.constant 0.000000e+00 : f32
    %270 = vector.shape_cast %268 : vector<1x128xi1> to vector<1x128xi1>
    %271 = vector.broadcast %270 : vector<1x128xi1> to vector<32x128xi1>
    %272 = vector.shape_cast %269 : vector<32x1xf32> to vector<32x1xf32>
    %273 = vector.broadcast %272 : vector<32x1xf32> to vector<32x128xf32>
    %274 = vector.broadcast %cst_39 : f32 to vector<32x128xf32>
    %275 = arith.select %271, %273, %274 : vector<32x128xi1>, vector<32x128xf32>
    %276 = arith.addf %266, %275 : vector<32x128xf32>
    %c7_i32_40 = arith.constant 7 : i32
    %277 = vector.broadcast %c7_i32_40 : i32 to vector<1x128xi32>
    %278 = arith.cmpi eq, %2, %277 : vector<1x128xi32>
    %279 = vector.extract_strided_slice %205 {offsets = [0, 7], sizes = [32, 1], strides = [1, 1]} : vector<32x24xf32> to vector<32x1xf32>
    %cst_41 = arith.constant 0.000000e+00 : f32
    %280 = vector.shape_cast %278 : vector<1x128xi1> to vector<1x128xi1>
    %281 = vector.broadcast %280 : vector<1x128xi1> to vector<32x128xi1>
    %282 = vector.shape_cast %279 : vector<32x1xf32> to vector<32x1xf32>
    %283 = vector.broadcast %282 : vector<32x1xf32> to vector<32x128xf32>
    %284 = vector.broadcast %cst_41 : f32 to vector<32x128xf32>
    %285 = arith.select %281, %283, %284 : vector<32x128xi1>, vector<32x128xf32>
    %286 = arith.addf %276, %285 : vector<32x128xf32>
    %c8_i32_42 = arith.constant 8 : i32
    %287 = vector.broadcast %c8_i32_42 : i32 to vector<1x128xi32>
    %288 = arith.cmpi eq, %2, %287 : vector<1x128xi32>
    %289 = vector.extract_strided_slice %205 {offsets = [0, 8], sizes = [32, 1], strides = [1, 1]} : vector<32x24xf32> to vector<32x1xf32>
    %cst_43 = arith.constant 0.000000e+00 : f32
    %290 = vector.shape_cast %288 : vector<1x128xi1> to vector<1x128xi1>
    %291 = vector.broadcast %290 : vector<1x128xi1> to vector<32x128xi1>
    %292 = vector.shape_cast %289 : vector<32x1xf32> to vector<32x1xf32>
    %293 = vector.broadcast %292 : vector<32x1xf32> to vector<32x128xf32>
    %294 = vector.broadcast %cst_43 : f32 to vector<32x128xf32>
    %295 = arith.select %291, %293, %294 : vector<32x128xi1>, vector<32x128xf32>
    %296 = arith.addf %286, %295 : vector<32x128xf32>
    %c9_i32_44 = arith.constant 9 : i32
    %297 = vector.broadcast %c9_i32_44 : i32 to vector<1x128xi32>
    %298 = arith.cmpi eq, %2, %297 : vector<1x128xi32>
    %299 = vector.extract_strided_slice %205 {offsets = [0, 9], sizes = [32, 1], strides = [1, 1]} : vector<32x24xf32> to vector<32x1xf32>
    %cst_45 = arith.constant 0.000000e+00 : f32
    %300 = vector.shape_cast %298 : vector<1x128xi1> to vector<1x128xi1>
    %301 = vector.broadcast %300 : vector<1x128xi1> to vector<32x128xi1>
    %302 = vector.shape_cast %299 : vector<32x1xf32> to vector<32x1xf32>
    %303 = vector.broadcast %302 : vector<32x1xf32> to vector<32x128xf32>
    %304 = vector.broadcast %cst_45 : f32 to vector<32x128xf32>
    %305 = arith.select %301, %303, %304 : vector<32x128xi1>, vector<32x128xf32>
    %306 = arith.addf %296, %305 : vector<32x128xf32>
    %c10_i32_46 = arith.constant 10 : i32
    %307 = vector.broadcast %c10_i32_46 : i32 to vector<1x128xi32>
    %308 = arith.cmpi eq, %2, %307 : vector<1x128xi32>
    %309 = vector.extract_strided_slice %205 {offsets = [0, 10], sizes = [32, 1], strides = [1, 1]} : vector<32x24xf32> to vector<32x1xf32>
    %cst_47 = arith.constant 0.000000e+00 : f32
    %310 = vector.shape_cast %308 : vector<1x128xi1> to vector<1x128xi1>
    %311 = vector.broadcast %310 : vector<1x128xi1> to vector<32x128xi1>
    %312 = vector.shape_cast %309 : vector<32x1xf32> to vector<32x1xf32>
    %313 = vector.broadcast %312 : vector<32x1xf32> to vector<32x128xf32>
    %314 = vector.broadcast %cst_47 : f32 to vector<32x128xf32>
    %315 = arith.select %311, %313, %314 : vector<32x128xi1>, vector<32x128xf32>
    %316 = arith.addf %306, %315 : vector<32x128xf32>
    %c11_i32_48 = arith.constant 11 : i32
    %317 = vector.broadcast %c11_i32_48 : i32 to vector<1x128xi32>
    %318 = arith.cmpi eq, %2, %317 : vector<1x128xi32>
    %319 = vector.extract_strided_slice %205 {offsets = [0, 11], sizes = [32, 1], strides = [1, 1]} : vector<32x24xf32> to vector<32x1xf32>
    %cst_49 = arith.constant 0.000000e+00 : f32
    %320 = vector.shape_cast %318 : vector<1x128xi1> to vector<1x128xi1>
    %321 = vector.broadcast %320 : vector<1x128xi1> to vector<32x128xi1>
    %322 = vector.shape_cast %319 : vector<32x1xf32> to vector<32x1xf32>
    %323 = vector.broadcast %322 : vector<32x1xf32> to vector<32x128xf32>
    %324 = vector.broadcast %cst_49 : f32 to vector<32x128xf32>
    %325 = arith.select %321, %323, %324 : vector<32x128xi1>, vector<32x128xf32>
    %326 = arith.addf %316, %325 : vector<32x128xf32>
    %c12_i32_50 = arith.constant 12 : i32
    %327 = vector.broadcast %c12_i32_50 : i32 to vector<1x128xi32>
    %328 = arith.cmpi eq, %2, %327 : vector<1x128xi32>
    %329 = vector.extract_strided_slice %205 {offsets = [0, 12], sizes = [32, 1], strides = [1, 1]} : vector<32x24xf32> to vector<32x1xf32>
    %cst_51 = arith.constant 0.000000e+00 : f32
    %330 = vector.shape_cast %328 : vector<1x128xi1> to vector<1x128xi1>
    %331 = vector.broadcast %330 : vector<1x128xi1> to vector<32x128xi1>
    %332 = vector.shape_cast %329 : vector<32x1xf32> to vector<32x1xf32>
    %333 = vector.broadcast %332 : vector<32x1xf32> to vector<32x128xf32>
    %334 = vector.broadcast %cst_51 : f32 to vector<32x128xf32>
    %335 = arith.select %331, %333, %334 : vector<32x128xi1>, vector<32x128xf32>
    %336 = arith.addf %326, %335 : vector<32x128xf32>
    %c13_i32_52 = arith.constant 13 : i32
    %337 = vector.broadcast %c13_i32_52 : i32 to vector<1x128xi32>
    %338 = arith.cmpi eq, %2, %337 : vector<1x128xi32>
    %339 = vector.extract_strided_slice %205 {offsets = [0, 13], sizes = [32, 1], strides = [1, 1]} : vector<32x24xf32> to vector<32x1xf32>
    %cst_53 = arith.constant 0.000000e+00 : f32
    %340 = vector.shape_cast %338 : vector<1x128xi1> to vector<1x128xi1>
    %341 = vector.broadcast %340 : vector<1x128xi1> to vector<32x128xi1>
    %342 = vector.shape_cast %339 : vector<32x1xf32> to vector<32x1xf32>
    %343 = vector.broadcast %342 : vector<32x1xf32> to vector<32x128xf32>
    %344 = vector.broadcast %cst_53 : f32 to vector<32x128xf32>
    %345 = arith.select %341, %343, %344 : vector<32x128xi1>, vector<32x128xf32>
    %346 = arith.addf %336, %345 : vector<32x128xf32>
    %c14_i32_54 = arith.constant 14 : i32
    %347 = vector.broadcast %c14_i32_54 : i32 to vector<1x128xi32>
    %348 = arith.cmpi eq, %2, %347 : vector<1x128xi32>
    %349 = vector.extract_strided_slice %205 {offsets = [0, 14], sizes = [32, 1], strides = [1, 1]} : vector<32x24xf32> to vector<32x1xf32>
    %cst_55 = arith.constant 0.000000e+00 : f32
    %350 = vector.shape_cast %348 : vector<1x128xi1> to vector<1x128xi1>
    %351 = vector.broadcast %350 : vector<1x128xi1> to vector<32x128xi1>
    %352 = vector.shape_cast %349 : vector<32x1xf32> to vector<32x1xf32>
    %353 = vector.broadcast %352 : vector<32x1xf32> to vector<32x128xf32>
    %354 = vector.broadcast %cst_55 : f32 to vector<32x128xf32>
    %355 = arith.select %351, %353, %354 : vector<32x128xi1>, vector<32x128xf32>
    %356 = arith.addf %346, %355 : vector<32x128xf32>
    %c15_i32_56 = arith.constant 15 : i32
    %357 = vector.broadcast %c15_i32_56 : i32 to vector<1x128xi32>
    %358 = arith.cmpi eq, %2, %357 : vector<1x128xi32>
    %359 = vector.extract_strided_slice %205 {offsets = [0, 15], sizes = [32, 1], strides = [1, 1]} : vector<32x24xf32> to vector<32x1xf32>
    %cst_57 = arith.constant 0.000000e+00 : f32
    %360 = vector.shape_cast %358 : vector<1x128xi1> to vector<1x128xi1>
    %361 = vector.broadcast %360 : vector<1x128xi1> to vector<32x128xi1>
    %362 = vector.shape_cast %359 : vector<32x1xf32> to vector<32x1xf32>
    %363 = vector.broadcast %362 : vector<32x1xf32> to vector<32x128xf32>
    %364 = vector.broadcast %cst_57 : f32 to vector<32x128xf32>
    %365 = arith.select %361, %363, %364 : vector<32x128xi1>, vector<32x128xf32>
    %366 = arith.addf %356, %365 : vector<32x128xf32>
    %c16_i32_58 = arith.constant 16 : i32
    %367 = vector.broadcast %c16_i32_58 : i32 to vector<1x128xi32>
    %368 = arith.cmpi eq, %2, %367 : vector<1x128xi32>
    %369 = vector.extract_strided_slice %205 {offsets = [0, 16], sizes = [32, 1], strides = [1, 1]} : vector<32x24xf32> to vector<32x1xf32>
    %cst_59 = arith.constant 0.000000e+00 : f32
    %370 = vector.shape_cast %368 : vector<1x128xi1> to vector<1x128xi1>
    %371 = vector.broadcast %370 : vector<1x128xi1> to vector<32x128xi1>
    %372 = vector.shape_cast %369 : vector<32x1xf32> to vector<32x1xf32>
    %373 = vector.broadcast %372 : vector<32x1xf32> to vector<32x128xf32>
    %374 = vector.broadcast %cst_59 : f32 to vector<32x128xf32>
    %375 = arith.select %371, %373, %374 : vector<32x128xi1>, vector<32x128xf32>
    %376 = arith.addf %366, %375 : vector<32x128xf32>
    %c17_i32_60 = arith.constant 17 : i32
    %377 = vector.broadcast %c17_i32_60 : i32 to vector<1x128xi32>
    %378 = arith.cmpi eq, %2, %377 : vector<1x128xi32>
    %379 = vector.extract_strided_slice %205 {offsets = [0, 17], sizes = [32, 1], strides = [1, 1]} : vector<32x24xf32> to vector<32x1xf32>
    %cst_61 = arith.constant 0.000000e+00 : f32
    %380 = vector.shape_cast %378 : vector<1x128xi1> to vector<1x128xi1>
    %381 = vector.broadcast %380 : vector<1x128xi1> to vector<32x128xi1>
    %382 = vector.shape_cast %379 : vector<32x1xf32> to vector<32x1xf32>
    %383 = vector.broadcast %382 : vector<32x1xf32> to vector<32x128xf32>
    %384 = vector.broadcast %cst_61 : f32 to vector<32x128xf32>
    %385 = arith.select %381, %383, %384 : vector<32x128xi1>, vector<32x128xf32>
    %386 = arith.addf %376, %385 : vector<32x128xf32>
    %c18_i32_62 = arith.constant 18 : i32
    %387 = vector.broadcast %c18_i32_62 : i32 to vector<1x128xi32>
    %388 = arith.cmpi eq, %2, %387 : vector<1x128xi32>
    %389 = vector.extract_strided_slice %205 {offsets = [0, 18], sizes = [32, 1], strides = [1, 1]} : vector<32x24xf32> to vector<32x1xf32>
    %cst_63 = arith.constant 0.000000e+00 : f32
    %390 = vector.shape_cast %388 : vector<1x128xi1> to vector<1x128xi1>
    %391 = vector.broadcast %390 : vector<1x128xi1> to vector<32x128xi1>
    %392 = vector.shape_cast %389 : vector<32x1xf32> to vector<32x1xf32>
    %393 = vector.broadcast %392 : vector<32x1xf32> to vector<32x128xf32>
    %394 = vector.broadcast %cst_63 : f32 to vector<32x128xf32>
    %395 = arith.select %391, %393, %394 : vector<32x128xi1>, vector<32x128xf32>
    %396 = arith.addf %386, %395 : vector<32x128xf32>
    %c19_i32_64 = arith.constant 19 : i32
    %397 = vector.broadcast %c19_i32_64 : i32 to vector<1x128xi32>
    %398 = arith.cmpi eq, %2, %397 : vector<1x128xi32>
    %399 = vector.extract_strided_slice %205 {offsets = [0, 19], sizes = [32, 1], strides = [1, 1]} : vector<32x24xf32> to vector<32x1xf32>
    %cst_65 = arith.constant 0.000000e+00 : f32
    %400 = vector.shape_cast %398 : vector<1x128xi1> to vector<1x128xi1>
    %401 = vector.broadcast %400 : vector<1x128xi1> to vector<32x128xi1>
    %402 = vector.shape_cast %399 : vector<32x1xf32> to vector<32x1xf32>
    %403 = vector.broadcast %402 : vector<32x1xf32> to vector<32x128xf32>
    %404 = vector.broadcast %cst_65 : f32 to vector<32x128xf32>
    %405 = arith.select %401, %403, %404 : vector<32x128xi1>, vector<32x128xf32>
    %406 = arith.addf %396, %405 : vector<32x128xf32>
    %c20_i32 = arith.constant 20 : i32
    %407 = vector.broadcast %c20_i32 : i32 to vector<1x128xi32>
    %408 = arith.cmpi eq, %2, %407 : vector<1x128xi32>
    %409 = vector.extract_strided_slice %205 {offsets = [0, 20], sizes = [32, 1], strides = [1, 1]} : vector<32x24xf32> to vector<32x1xf32>
    %cst_66 = arith.constant 0.000000e+00 : f32
    %410 = vector.shape_cast %408 : vector<1x128xi1> to vector<1x128xi1>
    %411 = vector.broadcast %410 : vector<1x128xi1> to vector<32x128xi1>
    %412 = vector.shape_cast %409 : vector<32x1xf32> to vector<32x1xf32>
    %413 = vector.broadcast %412 : vector<32x1xf32> to vector<32x128xf32>
    %414 = vector.broadcast %cst_66 : f32 to vector<32x128xf32>
    %415 = arith.select %411, %413, %414 : vector<32x128xi1>, vector<32x128xf32>
    %416 = arith.addf %406, %415 : vector<32x128xf32>
    %c21_i32 = arith.constant 21 : i32
    %417 = vector.broadcast %c21_i32 : i32 to vector<1x128xi32>
    %418 = arith.cmpi eq, %2, %417 : vector<1x128xi32>
    %419 = vector.extract_strided_slice %205 {offsets = [0, 21], sizes = [32, 1], strides = [1, 1]} : vector<32x24xf32> to vector<32x1xf32>
    %cst_67 = arith.constant 0.000000e+00 : f32
    %420 = vector.shape_cast %418 : vector<1x128xi1> to vector<1x128xi1>
    %421 = vector.broadcast %420 : vector<1x128xi1> to vector<32x128xi1>
    %422 = vector.shape_cast %419 : vector<32x1xf32> to vector<32x1xf32>
    %423 = vector.broadcast %422 : vector<32x1xf32> to vector<32x128xf32>
    %424 = vector.broadcast %cst_67 : f32 to vector<32x128xf32>
    %425 = arith.select %421, %423, %424 : vector<32x128xi1>, vector<32x128xf32>
    %426 = arith.addf %416, %425 : vector<32x128xf32>
    %c22_i32 = arith.constant 22 : i32
    %427 = vector.broadcast %c22_i32 : i32 to vector<1x128xi32>
    %428 = arith.cmpi eq, %2, %427 : vector<1x128xi32>
    %429 = vector.extract_strided_slice %205 {offsets = [0, 22], sizes = [32, 1], strides = [1, 1]} : vector<32x24xf32> to vector<32x1xf32>
    %cst_68 = arith.constant 0.000000e+00 : f32
    %430 = vector.shape_cast %428 : vector<1x128xi1> to vector<1x128xi1>
    %431 = vector.broadcast %430 : vector<1x128xi1> to vector<32x128xi1>
    %432 = vector.shape_cast %429 : vector<32x1xf32> to vector<32x1xf32>
    %433 = vector.broadcast %432 : vector<32x1xf32> to vector<32x128xf32>
    %434 = vector.broadcast %cst_68 : f32 to vector<32x128xf32>
    %435 = arith.select %431, %433, %434 : vector<32x128xi1>, vector<32x128xf32>
    %436 = arith.addf %426, %435 : vector<32x128xf32>
    %c23_i32 = arith.constant 23 : i32
    %437 = vector.broadcast %c23_i32 : i32 to vector<1x128xi32>
    %438 = arith.cmpi eq, %2, %437 : vector<1x128xi32>
    %439 = vector.extract_strided_slice %205 {offsets = [0, 23], sizes = [32, 1], strides = [1, 1]} : vector<32x24xf32> to vector<32x1xf32>
    %cst_69 = arith.constant 0.000000e+00 : f32
    %440 = vector.shape_cast %438 : vector<1x128xi1> to vector<1x128xi1>
    %441 = vector.broadcast %440 : vector<1x128xi1> to vector<32x128xi1>
    %442 = vector.shape_cast %439 : vector<32x1xf32> to vector<32x1xf32>
    %443 = vector.broadcast %442 : vector<32x1xf32> to vector<32x128xf32>
    %444 = vector.broadcast %cst_69 : f32 to vector<32x128xf32>
    %445 = arith.select %441, %443, %444 : vector<32x128xi1>, vector<32x128xf32>
    %446 = arith.addf %436, %445 : vector<32x128xf32>
    %c0_70 = arith.constant 0 : index
    %c0_71 = arith.constant 0 : index
    %447 = vector.load %arg11[%c0_70, %c0_71] : memref<32x128xf32, #tpu.memory_space<vmem>>, vector<32x128xf32>
    tpu.vector_store %arg11[%c0_70, %c0_71], %204 {strides = array<i32>} : memref<32x128xf32, #tpu.memory_space<vmem>>, vector<32x128xf32>,
    %c0_72 = arith.constant 0 : index
    %c0_73 = arith.constant 0 : index
    %448 = vector.load %arg12[%c0_72, %c0_73] : memref<32x128xf32, #tpu.memory_space<vmem>>, vector<32x128xf32>
    tpu.vector_store %arg12[%c0_72, %c0_73], %446 {strides = array<i32>} : memref<32x128xf32, #tpu.memory_space<vmem>>, vector<32x128xf32>,
    %c0_74 = arith.constant 0 : index
    %c0_75 = arith.constant 0 : index
    %449 = vector.load %arg4[%c0_74, %c0_75] : memref<32x32xf32, #tpu.memory_space<vmem>>, vector<32x32xf32>
    %cst_76 = arith.constant dense<0.000000e+00> : vector<32x128xf32>
    %450 = tpu.matmul %449, %204, %cst_76 {dimension_numbers = #tpu.dot_dimension_numbers<[1], [0], [0], [1], [0, 0, 1, 1], [], []>} : vector<32x32xf32>, vector<32x128xf32>, vector<32x128xf32> -> vector<32x128xf32>
    %c0_77 = arith.constant 0 : index
    %c0_78 = arith.constant 0 : index
    %451 = vector.load %arg5[%c0_77, %c0_78] : memref<32x32xf32, #tpu.memory_space<vmem>>, vector<32x32xf32>
    %cst_79 = arith.constant dense<0.000000e+00> : vector<32x128xf32>
    %452 = tpu.matmul %451, %446, %cst_79 {dimension_numbers = #tpu.dot_dimension_numbers<[1], [0], [0], [1], [0, 0, 1, 1], [], []>} : vector<32x32xf32>, vector<32x128xf32>, vector<32x128xf32> -> vector<32x128xf32>
    %453 = arith.addf %450, %452 : vector<32x128xf32>
    %c0_80 = arith.constant 0 : index
    %c0_81 = arith.constant 0 : index
    %454 = vector.load %arg6[%c0_80, %c0_81] : memref<32x1xf32, #tpu.memory_space<vmem>>, vector<32x1xf32>
    %455 = vector.broadcast %454 : vector<32x1xf32> to vector<32x128xf32>
    %456 = arith.addf %453, %455 : vector<32x128xf32>
    %cst_82 = arith.constant 0.000000e+00 : f32
    %457 = vector.broadcast %cst_82 : f32 to vector<32x128xf32>
    %458 = arith.maximumf %456, %457 : vector<32x128xf32>
    %c0_83 = arith.constant 0 : index
    %c0_84 = arith.constant 0 : index
    %459 = vector.load %arg7[%c0_83, %c0_84] : memref<16x32xf32, #tpu.memory_space<vmem>>, vector<16x32xf32>
    %cst_85 = arith.constant dense<0.000000e+00> : vector<16x128xf32>
    %460 = tpu.matmul %459, %458, %cst_85 {dimension_numbers = #tpu.dot_dimension_numbers<[1], [0], [0], [1], [0, 0, 1, 1], [], []>} : vector<16x32xf32>, vector<32x128xf32>, vector<16x128xf32> -> vector<16x128xf32>
    %c0_86 = arith.constant 0 : index
    %c0_87 = arith.constant 0 : index
    %461 = vector.load %arg8[%c0_86, %c0_87] : memref<16x1xf32, #tpu.memory_space<vmem>>, vector<16x1xf32>
    %462 = vector.broadcast %461 : vector<16x1xf32> to vector<16x128xf32>
    %463 = arith.addf %460, %462 : vector<16x128xf32>
    %cst_88 = arith.constant 0.000000e+00 : f32
    %464 = vector.broadcast %cst_88 : f32 to vector<16x128xf32>
    %465 = arith.maximumf %463, %464 : vector<16x128xf32>
    %c0_89 = arith.constant 0 : index
    %c0_90 = arith.constant 0 : index
    %466 = vector.load %arg9[%c0_89, %c0_90] : memref<16x1xf32, #tpu.memory_space<vmem>>, vector<16x1xf32>
    %467 = vector.broadcast %466 : vector<16x1xf32> to vector<16x128xf32>
    %468 = arith.mulf %465, %467 : vector<16x128xf32>
    %cst_91 = arith.constant dense<0.000000e+00> : vector<128xf32>
    %469 = vector.multi_reduction <add>, %468, %cst_91 [0] : vector<16x128xf32> to vector<128xf32>
    %470 = vector.shape_cast %469 : vector<128xf32> to vector<1x128xf32>
    %471 = vector.shape_cast %470 : vector<1x128xf32> to vector<1x1x128xf32>
    %c0_92 = arith.constant 0 : index
    %c0_93 = arith.constant 0 : index
    %c0_94 = arith.constant 0 : index
    %472 = vector.load %arg10[%c0_92, %c0_93, %c0_94] : memref<1x1x128xf32, #tpu.memory_space<vmem>>, vector<1x1x128xf32>
    tpu.vector_store %arg10[%c0_92, %c0_93, %c0_94], %471 {strides = array<i32>} : memref<1x1x128xf32, #tpu.memory_space<vmem>>, vector<1x1x128xf32>,
    return
  }
  func.func @transform_0(%arg0: i32) -> (i32, i32) {
    %c0_i32 = arith.constant 0 : i32
    %c0_i32_0 = arith.constant 0 : i32
    return %c0_i32, %arg0 : i32, i32
  }
  func.func @transform_1(%arg0: i32) -> (i32, i32) {
    %c0_i32 = arith.constant 0 : i32
    %c0_i32_0 = arith.constant 0 : i32
    %c0_i32_1 = arith.constant 0 : i32
    return %c0_i32, %c0_i32_0 : i32, i32
  }
  func.func @transform_2(%arg0: i32) -> (i32, i32) {
    %c0_i32 = arith.constant 0 : i32
    %c0_i32_0 = arith.constant 0 : i32
    %c0_i32_1 = arith.constant 0 : i32
    return %c0_i32, %c0_i32_0 : i32, i32
  }
  func.func @transform_3(%arg0: i32) -> (i32, i32) {
    %c0_i32 = arith.constant 0 : i32
    %c0_i32_0 = arith.constant 0 : i32
    %c0_i32_1 = arith.constant 0 : i32
    return %c0_i32, %c0_i32_0 : i32, i32
  }
  func.func @transform_4(%arg0: i32) -> (i32, i32) {
    %c0_i32 = arith.constant 0 : i32
    %c0_i32_0 = arith.constant 0 : i32
    %c0_i32_1 = arith.constant 0 : i32
    return %c0_i32, %c0_i32_0 : i32, i32
  }
  func.func @transform_5(%arg0: i32) -> (i32, i32) {
    %c0_i32 = arith.constant 0 : i32
    %c0_i32_0 = arith.constant 0 : i32
    %c0_i32_1 = arith.constant 0 : i32
    return %c0_i32, %c0_i32_0 : i32, i32
  }
  func.func @transform_6(%arg0: i32) -> (i32, i32) {
    %c0_i32 = arith.constant 0 : i32
    %c0_i32_0 = arith.constant 0 : i32
    %c0_i32_1 = arith.constant 0 : i32
    return %c0_i32, %c0_i32_0 : i32, i32
  }
  func.func @transform_7(%arg0: i32) -> (i32, i32) {
    %c0_i32 = arith.constant 0 : i32
    %c0_i32_0 = arith.constant 0 : i32
    %c0_i32_1 = arith.constant 0 : i32
    return %c0_i32, %c0_i32_0 : i32, i32
  }
  func.func @transform_8(%arg0: i32) -> (i32, i32) {
    %c0_i32 = arith.constant 0 : i32
    %c0_i32_0 = arith.constant 0 : i32
    %c0_i32_1 = arith.constant 0 : i32
    return %c0_i32, %c0_i32_0 : i32, i32
  }
  func.func @transform_9(%arg0: i32) -> (i32, i32, i32) {
    %c0_i32 = arith.constant 0 : i32
    %c0_i32_0 = arith.constant 0 : i32
    %c0_i32_1 = arith.constant 0 : i32
    return %arg0, %c0_i32, %c0_i32_0 : i32, i32, i32
  }
  func.func @transform_10(%arg0: i32) -> (i32, i32) {
    %c0_i32 = arith.constant 0 : i32
    %c0_i32_0 = arith.constant 0 : i32
    return %c0_i32, %arg0 : i32, i32
  }
  func.func @transform_11(%arg0: i32) -> (i32, i32) {
    %c0_i32 = arith.constant 0 : i32
    %c0_i32_0 = arith.constant 0 : i32
    return %c0_i32, %arg0 : i32, i32
  }
}

</mosaic_0001>

<llo_original>
// kernel: tpu_custom_call.1
$region0: #{tpu_custom_call.1}
  #allocation0 [shape = 'u32[]', space=smem, size = 0x4, offset = 0x4, fixed_abs, tag = 'smem constant byte address 0x4 - core index']
  #allocation1 [shape = 'u32[72,128]{1,0:T(1,128)}', space=vmem, size = 0x9000, scoped, tag = 'internal scratch']
  %s0 = inlined_call_operand.vmem [shape: s32[2,256], index: 0, kind: input, shape index: {}]
  %s1 = inlined_call_operand.vmem [shape: f32[32,20], index: 1, kind: input, shape index: {}]
  %s2 = inlined_call_operand.vmem [shape: f32[32,24], index: 2, kind: input, shape index: {}]
  %s3 = inlined_call_operand.vmem [shape: f32[32,32], index: 3, kind: input, shape index: {}]
  %s4 = inlined_call_operand.vmem [shape: f32[32,32], index: 4, kind: input, shape index: {}]
  %s5 = inlined_call_operand.vmem [shape: f32[32,1], index: 5, kind: input, shape index: {}]
  %s6 = inlined_call_operand.vmem [shape: f32[16,32], index: 6, kind: input, shape index: {}]
  %s7 = inlined_call_operand.vmem [shape: f32[16,1], index: 7, kind: input, shape index: {}]
  %s8 = inlined_call_operand.vmem [shape: f32[16,1], index: 8, kind: input, shape index: {}]
  %s9 = inlined_call_operand.hbm [shape: f32[2,1,128], index: 9, kind: output, shape index: {0}]
  %s10 = inlined_call_operand.hbm [shape: f32[32,256], index: 10, kind: output, shape index: {1}]
  %s11 = inlined_call_operand.hbm [shape: f32[32,256], index: 11, kind: output, shape index: {2}]
  %12 = xla_tuple %s9, %s10, %s11
  %s13 = sld [smem:[#allocation0]]
  $region85: #{tpu_custom_call.1} parent=0
    _
  %s15 = ssub.s32 1, %s13
  %s16 = scalar_select 0, %s15, %s13
  $region1: #{tpu_custom_call.1} parent=0
    #allocation2 [shape = 'u8[1024]{0}', space=vmem, size = 0x400, scoped, tag = 'output window, operand 0']
    #allocation3 [shape = 's32[2]{0}', space=sflag, size = 0x8, scoped, tag = 'scoped memory for tpu_custom_call.1']
    #allocation4 [shape = 'u8[32768]{0}', space=vmem, size = 0x8000, scoped, tag = 'output window, operand 1']
    #allocation5 [shape = 's32[2]{0}', space=sflag, size = 0x8, scoped, tag = 'scoped memory for tpu_custom_call.1']
    #allocation6 [shape = 'u8[32768]{0}', space=vmem, size = 0x8000, scoped, tag = 'output window, operand 2']
    %17 = vsyncpa [#allocation3], 0
    %s18 = scalar_lea.sflag [#allocation3], 1
    %19 = vsyncpa %s18, 0
    %20 = vsyncpa [#allocation5], 0
    %s21 = scalar_lea.sflag [#allocation5], 1
    %22 = vsyncpa %s21, 0
    loop: start=0, step=1, limit=4
    $region2: #{tpu_custom_call.1} parent=1 // loop_pre_header
      _
    $region3: #{tpu_custom_call.1} parent=1 // loop_header
      %s24 = sphi 0, %s28
      %p25 = scmp.ge.s32.totalorder %s24, 4
      %s34 = sphi 0, %s36
      %s37 = sphi 0, %s34
      %s38 = sphi 0, %s37
      %s54 = sphi 0, %s38
      %s58 = sphi 0, %s58
      %s60 = sphi 0, %s58
      %s61 = sphi 0, %s60
      %s75 = sphi 0, %s61
      %s79 = sphi 0, %s79
      %s81 = sphi 0, %s79
      %s82 = sphi 0, %s81
      %s96 = sphi 0, %s82
      %s100 = sphi 0, %s100
      %s102 = sphi 0, %s100
      %s103 = sphi 0, %s102
      %s117 = sphi 0, %s103
      %s121 = sphi 0, %s121
      %s123 = sphi 0, %s121
      %s124 = sphi 0, %s123
      %s138 = sphi 0, %s124
      %s142 = sphi 0, %s142
      %s144 = sphi 0, %s142
      %s145 = sphi 0, %s144
      %s159 = sphi 0, %s145
      %s163 = sphi 0, %s163
      %s165 = sphi 0, %s163
      %s166 = sphi 0, %s165
      %s180 = sphi 0, %s166
      %s184 = sphi 0, %s184
      %s186 = sphi 0, %s184
      %s187 = sphi 0, %s186
      %s201 = sphi 0, %s187
      %s205 = sphi 0, %s205
      %s207 = sphi 0, %s205
      %s208 = sphi 0, %s207
      %s222 = sphi 0, %s208
      %s228 = sphi 0, %s230
      %s231 = sphi 0, %s228
      %s232 = sphi 0, %s231
      %s248 = sphi 0, %s232
      %s254 = sphi 0, %s256
      %s257 = sphi 0, %s254
      %s258 = sphi 0, %s257
      %s274 = sphi 0, %s258
      %s280 = sphi 0, %s282
      %s283 = sphi 0, %s280
      %s284 = sphi 0, %s283
      %s300 = sphi 0, %s284
    $region4: #{tpu_custom_call.1} parent=1 // loop_header_branch
      %27 = sbr.rel (%p25) target = $region8
    $region5: #{tpu_custom_call.1} parent=1 // loop_body
      %s29 = ssub.s32 %s24, 1
      %s30 = ssub.s32 %s24, 2
      %s31 = sadd.s32 %s24, 1
      %s32 = ssub.s32 %s24, %s31
      %p33 = scmp.eq.s32.totalorder %s32, 0
      %s35 = sadd.s32 %s34, 1
      %s36 = scalar_select %p33, %s34, %s35
      %p39 = pneg %p33
      %p40 = scmp.eq.s32.totalorder %s24, 1
      %p41 = por %p39, %p40
      %p42 = scmp.ne.s32.totalorder %s34, %s37
      %p43 = scmp.eq.s32.totalorder %s24, 0
      %p44 = por %p42, %p43
      %p45 = scmp.ne.s32.totalorder %s34, %s37
      %p46 = scmp.eq.s32.totalorder %s29, 1
      %p47 = por %p45, %p46
      %p48 = scmp.ne.s32.totalorder %s37, %s38
      %p49 = scmp.eq.s32.totalorder %s29, 0
      %p50 = por %p48, %p49
      %p51 = scmp.ne.s32.totalorder %s37, %s38
      %p52 = scmp.eq.s32.totalorder %s30, 1
      %p53 = por %p51, %p52
      %p55 = scmp.ne.s32.totalorder %s38, %s54
      %p56 = scmp.eq.s32.totalorder %s30, 0
      %p57 = por %p55, %p56
      %s59 = sadd.s32 %s58, 1
      %p62 = scmp.eq.s32.totalorder %s24, 1
      %p63 = scmp.ne.s32.totalorder %s58, %s60
      %p64 = scmp.eq.s32.totalorder %s24, 0
      %p65 = por %p63, %p64
      %p66 = scmp.ne.s32.totalorder %s58, %s60
      %p67 = scmp.eq.s32.totalorder %s29, 1
      %p68 = por %p66, %p67
      %p69 = scmp.ne.s32.totalorder %s60, %s61
      %p70 = scmp.eq.s32.totalorder %s29, 0
      %p71 = por %p69, %p70
      %p72 = scmp.ne.s32.totalorder %s60, %s61
      %p73 = scmp.eq.s32.totalorder %s30, 1
      %p74 = por %p72, %p73
      %p76 = scmp.ne.s32.totalorder %s61, %s75
      %p77 = scmp.eq.s32.totalorder %s30, 0
      %p78 = por %p76, %p77
      %s80 = sadd.s32 %s79, 1
      %p83 = scmp.eq.s32.totalorder %s24, 1
      %p84 = scmp.ne.s32.totalorder %s79, %s81
      %p85 = scmp.eq.s32.totalorder %s24, 0
      %p86 = por %p84, %p85
      %p87 = scmp.ne.s32.totalorder %s79, %s81
      %p88 = scmp.eq.s32.totalorder %s29, 1
      %p89 = por %p87, %p88
      %p90 = scmp.ne.s32.totalorder %s81, %s82
      %p91 = scmp.eq.s32.totalorder %s29, 0
      %p92 = por %p90, %p91
      %p93 = scmp.ne.s32.totalorder %s81, %s82
      %p94 = scmp.eq.s32.totalorder %s30, 1
      %p95 = por %p93, %p94
      %p97 = scmp.ne.s32.totalorder %s82, %s96
      %p98 = scmp.eq.s32.totalorder %s30, 0
      %p99 = por %p97, %p98
      %s101 = sadd.s32 %s100, 1
      %p104 = scmp.eq.s32.totalorder %s24, 1
      %p105 = scmp.ne.s32.totalorder %s100, %s102
      %p106 = scmp.eq.s32.totalorder %s24, 0
      %p107 = por %p105, %p106
      %p108 = scmp.ne.s32.totalorder %s100, %s102
      %p109 = scmp.eq.s32.totalorder %s29, 1
      %p110 = por %p108, %p109
      %p111 = scmp.ne.s32.totalorder %s102, %s103
      %p112 = scmp.eq.s32.totalorder %s29, 0
      %p113 = por %p111, %p112
      %p114 = scmp.ne.s32.totalorder %s102, %s103
      %p115 = scmp.eq.s32.totalorder %s30, 1
      %p116 = por %p114, %p115
      %p118 = scmp.ne.s32.totalorder %s103, %s117
      %p119 = scmp.eq.s32.totalorder %s30, 0
      %p120 = por %p118, %p119
      %s122 = sadd.s32 %s121, 1
      %p125 = scmp.eq.s32.totalorder %s24, 1
      %p126 = scmp.ne.s32.totalorder %s121, %s123
      %p127 = scmp.eq.s32.totalorder %s24, 0
      %p128 = por %p126, %p127
      %p129 = scmp.ne.s32.totalorder %s121, %s123
      %p130 = scmp.eq.s32.totalorder %s29, 1
      %p131 = por %p129, %p130
      %p132 = scmp.ne.s32.totalorder %s123, %s124
      %p133 = scmp.eq.s32.totalorder %s29, 0
      %p134 = por %p132, %p133
      %p135 = scmp.ne.s32.totalorder %s123, %s124
      %p136 = scmp.eq.s32.totalorder %s30, 1
      %p137 = por %p135, %p136
      %p139 = scmp.ne.s32.totalorder %s124, %s138
      %p140 = scmp.eq.s32.totalorder %s30, 0
      %p141 = por %p139, %p140
      %s143 = sadd.s32 %s142, 1
      %p146 = scmp.eq.s32.totalorder %s24, 1
      %p147 = scmp.ne.s32.totalorder %s142, %s144
      %p148 = scmp.eq.s32.totalorder %s24, 0
      %p149 = por %p147, %p148
      %p150 = scmp.ne.s32.totalorder %s142, %s144
      %p151 = scmp.eq.s32.totalorder %s29, 1
      %p152 = por %p150, %p151
      %p153 = scmp.ne.s32.totalorder %s144, %s145
      %p154 = scmp.eq.s32.totalorder %s29, 0
      %p155 = por %p153, %p154
      %p156 = scmp.ne.s32.totalorder %s144, %s145
      %p157 = scmp.eq.s32.totalorder %s30, 1
      %p158 = por %p156, %p157
      %p160 = scmp.ne.s32.totalorder %s145, %s159
      %p161 = scmp.eq.s32.totalorder %s30, 0
      %p162 = por %p160, %p161
      %s164 = sadd.s32 %s163, 1
      %p167 = scmp.eq.s32.totalorder %s24, 1
      %p168 = scmp.ne.s32.totalorder %s163, %s165
      %p169 = scmp.eq.s32.totalorder %s24, 0
      %p170 = por %p168, %p169
      %p171 = scmp.ne.s32.totalorder %s163, %s165
      %p172 = scmp.eq.s32.totalorder %s29, 1
      %p173 = por %p171, %p172
      %p174 = scmp.ne.s32.totalorder %s165, %s166
      %p175 = scmp.eq.s32.totalorder %s29, 0
      %p176 = por %p174, %p175
      %p177 = scmp.ne.s32.totalorder %s165, %s166
      %p178 = scmp.eq.s32.totalorder %s30, 1
      %p179 = por %p177, %p178
      %p181 = scmp.ne.s32.totalorder %s166, %s180
      %p182 = scmp.eq.s32.totalorder %s30, 0
      %p183 = por %p181, %p182
      %s185 = sadd.s32 %s184, 1
      %p188 = scmp.eq.s32.totalorder %s24, 1
      %p189 = scmp.ne.s32.totalorder %s184, %s186
      %p190 = scmp.eq.s32.totalorder %s24, 0
      %p191 = por %p189, %p190
      %p192 = scmp.ne.s32.totalorder %s184, %s186
      %p193 = scmp.eq.s32.totalorder %s29, 1
      %p194 = por %p192, %p193
      %p195 = scmp.ne.s32.totalorder %s186, %s187
      %p196 = scmp.eq.s32.totalorder %s29, 0
      %p197 = por %p195, %p196
      %p198 = scmp.ne.s32.totalorder %s186, %s187
      %p199 = scmp.eq.s32.totalorder %s30, 1
      %p200 = por %p198, %p199
      %p202 = scmp.ne.s32.totalorder %s187, %s201
      %p203 = scmp.eq.s32.totalorder %s30, 0
      %p204 = por %p202, %p203
      %s206 = sadd.s32 %s205, 1
      %p209 = scmp.eq.s32.totalorder %s24, 1
      %p210 = scmp.ne.s32.totalorder %s205, %s207
      %p211 = scmp.eq.s32.totalorder %s24, 0
      %p212 = por %p210, %p211
      %p213 = scmp.ne.s32.totalorder %s205, %s207
      %p214 = scmp.eq.s32.totalorder %s29, 1
      %p215 = por %p213, %p214
      %p216 = scmp.ne.s32.totalorder %s207, %s208
      %p217 = scmp.eq.s32.totalorder %s29, 0
      %p218 = por %p216, %p217
      %p219 = scmp.ne.s32.totalorder %s207, %s208
      %p220 = scmp.eq.s32.totalorder %s30, 1
      %p221 = por %p219, %p220
      %p223 = scmp.ne.s32.totalorder %s208, %s222
      %p224 = scmp.eq.s32.totalorder %s30, 0
      %p225 = por %p223, %p224
      %s226 = ssub.s32 %s24, %s31
      %p227 = scmp.eq.s32.totalorder %s226, 0
      %s229 = sadd.s32 %s228, 1
      %s230 = scalar_select %p227, %s228, %s229
      %p233 = pneg %p227
      %p234 = scmp.eq.s32.totalorder %s24, 1
      %p235 = por %p233, %p234
      %p236 = scmp.ne.s32.totalorder %s228, %s231
      %p237 = scmp.eq.s32.totalorder %s24, 0
      %p238 = por %p236, %p237
      %p239 = scmp.ne.s32.totalorder %s228, %s231
      %p240 = scmp.eq.s32.totalorder %s29, 1
      %p241 = por %p239, %p240
      %p242 = scmp.ne.s32.totalorder %s231, %s232
      %p243 = scmp.eq.s32.totalorder %s29, 0
      %p244 = por %p242, %p243
      %p245 = scmp.ne.s32.totalorder %s231, %s232
      %p246 = scmp.eq.s32.totalorder %s30, 1
      %p247 = por %p245, %p246
      %p249 = scmp.ne.s32.totalorder %s232, %s248
      %p250 = scmp.eq.s32.totalorder %s30, 0
      %p251 = por %p249, %p250
      %s252 = ssub.s32 %s24, %s31
      %p253 = scmp.eq.s32.totalorder %s252, 0
      %s255 = sadd.s32 %s254, 1
      %s256 = scalar_select %p253, %s254, %s255
      %p259 = pneg %p253
      %p260 = scmp.eq.s32.totalorder %s24, 1
      %p261 = por %p259, %p260
      %p262 = scmp.ne.s32.totalorder %s254, %s257
      %p263 = scmp.eq.s32.totalorder %s24, 0
      %p264 = por %p262, %p263
      %p265 = scmp.ne.s32.totalorder %s254, %s257
      %p266 = scmp.eq.s32.totalorder %s29, 1
      %p267 = por %p265, %p266
      %p268 = scmp.ne.s32.totalorder %s257, %s258
      %p269 = scmp.eq.s32.totalorder %s29, 0
      %p270 = por %p268, %p269
      %p271 = scmp.ne.s32.totalorder %s257, %s258
      %p272 = scmp.eq.s32.totalorder %s30, 1
      %p273 = por %p271, %p272
      %p275 = scmp.ne.s32.totalorder %s258, %s274
      %p276 = scmp.eq.s32.totalorder %s30, 0
      %p277 = por %p275, %p276
      %s278 = ssub.s32 %s24, %s31
      %p279 = scmp.eq.s32.totalorder %s278, 0
      %s281 = sadd.s32 %s280, 1
      %s282 = scalar_select %p279, %s280, %s281
      %p285 = pneg %p279
      %p286 = scmp.eq.s32.totalorder %s24, 1
      %p287 = por %p285, %p286
      %p288 = scmp.ne.s32.totalorder %s280, %s283
      %p289 = scmp.eq.s32.totalorder %s24, 0
      %p290 = por %p288, %p289
      %p291 = scmp.ne.s32.totalorder %s280, %s283
      %p292 = scmp.eq.s32.totalorder %s29, 1
      %p293 = por %p291, %p292
      %p294 = scmp.ne.s32.totalorder %s283, %s284
      %p295 = scmp.eq.s32.totalorder %s29, 0
      %p296 = por %p294, %p295
      %p297 = scmp.ne.s32.totalorder %s283, %s284
      %p298 = scmp.eq.s32.totalorder %s30, 1
      %p299 = por %p297, %p298
      %p301 = scmp.ne.s32.totalorder %s284, %s300
      %p302 = scmp.eq.s32.totalorder %s30, 0
      %p303 = por %p301, %p302
      %p304 = scmp.le.s32.totalorder 1, %s24
      %p305 = scmp.lt.s32.totalorder %s24, 3
      %p306 = pnand %p304, %p305
      %p307 = pneg %p306
      // Predicated region
      $region9: #{tpu_custom_call.1} parent=5 // pred_check
        _
      $region10: #{tpu_custom_call.1} parent=5 // pred_check_branch
        %309 = sbr.rel (%p306) target = $region12
      $region11: #{tpu_custom_call.1} parent=5 // pred_region
        %s310 = ssub.s32 %s24, 1
        // Predicated region
        $region13: #{tpu_custom_call.1} parent=11 // pred_check
          %p311 = pneg %p71
        $region14: #{tpu_custom_call.1} parent=11 // pred_check_branch
          %313 = sbr.rel (%p311) target = $region16
        $region15: #{tpu_custom_call.1} parent=11 // pred_region
          _
        $region16: #{tpu_custom_call.1} parent=11 // pred_fallthru
          _
        // Predicated region
        $region17: #{tpu_custom_call.1} parent=11 // pred_check
          %p314 = pneg %p92
        $region18: #{tpu_custom_call.1} parent=11 // pred_check_branch
          %316 = sbr.rel (%p314) target = $region20
        $region19: #{tpu_custom_call.1} parent=11 // pred_region
          _
        $region20: #{tpu_custom_call.1} parent=11 // pred_fallthru
          _
        // Predicated region
        $region21: #{tpu_custom_call.1} parent=11 // pred_check
          %p317 = pneg %p113
        $region22: #{tpu_custom_call.1} parent=11 // pred_check_branch
          %319 = sbr.rel (%p317) target = $region24
        $region23: #{tpu_custom_call.1} parent=11 // pred_region
          _
        $region24: #{tpu_custom_call.1} parent=11 // pred_fallthru
          _
        // Predicated region
        $region25: #{tpu_custom_call.1} parent=11 // pred_check
          %p320 = pneg %p134
        $region26: #{tpu_custom_call.1} parent=11 // pred_check_branch
          %322 = sbr.rel (%p320) target = $region28
        $region27: #{tpu_custom_call.1} parent=11 // pred_region
          _
        $region28: #{tpu_custom_call.1} parent=11 // pred_fallthru
          _
        // Predicated region
        $region29: #{tpu_custom_call.1} parent=11 // pred_check
          %p323 = pneg %p155
        $region30: #{tpu_custom_call.1} parent=11 // pred_check_branch
          %325 = sbr.rel (%p323) target = $region32
        $region31: #{tpu_custom_call.1} parent=11 // pred_region
          _
        $region32: #{tpu_custom_call.1} parent=11 // pred_fallthru
          _
        // Predicated region
        $region33: #{tpu_custom_call.1} parent=11 // pred_check
          %p326 = pneg %p176
        $region34: #{tpu_custom_call.1} parent=11 // pred_check_branch
          %328 = sbr.rel (%p326) target = $region36
        $region35: #{tpu_custom_call.1} parent=11 // pred_region
          _
        $region36: #{tpu_custom_call.1} parent=11 // pred_fallthru
          _
        // Predicated region
        $region37: #{tpu_custom_call.1} parent=11 // pred_check
          %p329 = pneg %p197
        $region38: #{tpu_custom_call.1} parent=11 // pred_check_branch
          %331 = sbr.rel (%p329) target = $region40
        $region39: #{tpu_custom_call.1} parent=11 // pred_region
          _
        $region40: #{tpu_custom_call.1} parent=11 // pred_fallthru
          _
        // Predicated region
        $region41: #{tpu_custom_call.1} parent=11 // pred_check
          %p332 = pneg %p218
        $region42: #{tpu_custom_call.1} parent=11 // pred_check_branch
          %334 = sbr.rel (%p332) target = $region44
        $region43: #{tpu_custom_call.1} parent=11 // pred_region
          _
        $region44: #{tpu_custom_call.1} parent=11 // pred_fallthru
          _
      $region12: #{tpu_custom_call.1} parent=5 // pred_fallthru
        _
      %p335 = scmp.lt.s32.totalorder %s24, 2
      // Predicated region
      $region45: #{tpu_custom_call.1} parent=5 // pred_check
        %p336 = pneg %p335
      $region46: #{tpu_custom_call.1} parent=5 // pred_check_branch
        %338 = sbr.rel (%p336) target = $region48
      $region47: #{tpu_custom_call.1} parent=5 // pred_region
        // Predicated region
        $region49: #{tpu_custom_call.1} parent=47 // pred_check
          %p339 = pneg %p44
        $region50: #{tpu_custom_call.1} parent=47 // pred_check_branch
          %341 = sbr.rel (%p339) target = $region52
        $region51: #{tpu_custom_call.1} parent=47 // pred_region
          %p342 = scmp.lt.s32.totalorder %s24, 1
          %s343 = scalar_select %p342, %s24, 1
          %s344 = smul.addr %s343, 2
          %s345 = scalar_lea.vmem %s0, %s344
        $region52: #{tpu_custom_call.1} parent=47 // pred_fallthru
          _
      $region48: #{tpu_custom_call.1} parent=5 // pred_fallthru
        _
      %p346 = scmp.le.s32.totalorder 1, %s24
      %p347 = scmp.lt.s32.totalorder %s24, 3
      %p348 = pnand %p346, %p347
      %p349 = pneg %p348
      // Predicated region
      $region53: #{tpu_custom_call.1} parent=5 // pred_check
        _
      $region54: #{tpu_custom_call.1} parent=5 // pred_check_branch
        %351 = sbr.rel (%p348) target = $region56
      $region55: #{tpu_custom_call.1} parent=5 // pred_region
        %s352 = ssub.s32 %s24, 1
        %p353 = scmp.lt.s32.totalorder %s29, 1
        %s354 = scalar_select %p353, %s29, 1
        %s355 = smul.addr %s354, 2
        %s356 = scalar_lea.vmem %s0, %s355
        %p357 = pneg %p50
        %p358 = pneg %p47
        %p359 = pneg %p71
        %p360 = pneg %p68
        %p361 = pneg %p92
        %p362 = pneg %p89
        %p363 = pneg %p113
        %p364 = pneg %p110
        %p365 = pneg %p134
        %p366 = pneg %p131
        %p367 = pneg %p155
        %p368 = pneg %p152
        %p369 = pneg %p176
        %p370 = pneg %p173
        %p371 = pneg %p197
        %p372 = pneg %p194
        %p373 = pneg %p218
        %p374 = pneg %p215
        %p375 = pneg %p244
        %p376 = pneg %p241
        %s377 = sand.u32 %s231, 1
        %s378 = scalar_lea.sflag [#allocation3], %s377
        %s379 = sand.u32 %s231, 1
        %s380 = scalar_lea.vmem [#allocation2], %s379
        %p381 = pneg %p270
        %p382 = pneg %p267
        %s383 = sand.u32 %s29, 1
        %s384 = scalar_lea.sflag [#allocation5], %s383
        %s385 = sand.u32 %s257, 1
        %s386 = smul.addr %s385, 32
        %s387 = scalar_lea.vmem [#allocation4], %s386
        %p388 = pneg %p296
        %p389 = pneg %p293
        %s390 = sand.u32 %s29, 1
        %s391 = scalar_lea.sflag [#allocation5], %s390
        %s392 = sand.u32 %s283, 1
        %s393 = smul.addr %s392, 32
        %s394 = scalar_lea.vmem [#allocation6], %s393
        %p395 = scmp.lt.s32.totalorder %s29, 1
        %s396 = scalar_select %p395, %s29, 1
        %s397 = smul.addr %s396, 2
        %s398 = scalar_lea.vmem %s0, %s397
        %v399 = vld [vmem:[%s398] sm:$0x3]
        %v400 = vld [vmem:[%s1] sm:$0xff]
        %v401 = vld [vmem:[%s1 + $0x8] sm:$0xff]
        %v402 = vld [vmem:[%s1 + $0x10] sm:$0xff]
        %v403 = vld [vmem:[%s1 + $0x18] sm:$0xff]
        %vm404 = vcmp.eq.s32.totalorder %v399, 0
        %v405 = vsel %vm404, 1, 0
        %v406 = vperm.slane %v405, 0
        %vm407 = vcmp.eq.s32.totalorder %v406, 1
        %409 = vset.pattern.permute.xlu0 0
        %410 = vperm.xlu0 %409, %v400
        %v411 = vpop.permute.xlu0 %410
        %414 = vset.pattern.permute.xlu0 0
        %415 = vperm.xlu0 %414, %v401
        %v416 = vpop.permute.xlu0 %415
        %419 = vset.pattern.permute.xlu0 0
        %420 = vperm.xlu0 %419, %v402
        %v421 = vpop.permute.xlu0 %420
        %424 = vset.pattern.permute.xlu0 0
        %425 = vperm.xlu0 %424, %v403
        %v426 = vpop.permute.xlu0 %425
        %v428 = vsel %vm407, %v411, 0.0
        %v429 = vsel %vm407, %v416, 0.0
        %v430 = vsel %vm407, %v421, 0.0
        %v431 = vsel %vm407, %v426, 0.0
        %v432 = vadd.f32 %v428, 0.0
        %v433 = vadd.f32 %v429, 0.0
        %v434 = vadd.f32 %v430, 0.0
        %v435 = vadd.f32 %v431, 0.0
        %vm436 = vcmp.eq.s32.totalorder %v399, 1
        %v437 = vsel %vm436, 1, 0
        %v438 = vperm.slane %v437, 0
        %vm439 = vcmp.eq.s32.totalorder %v438, 1
        %440 = vset.pattern.permute.xlu0 1
        %441 = vperm.xlu0 %440, %v400
        %v442 = vpop.permute.xlu0 %441
        %444 = vset.pattern.permute.xlu0 1
        %445 = vperm.xlu0 %444, %v401
        %v446 = vpop.permute.xlu0 %445
        %448 = vset.pattern.permute.xlu0 1
        %449 = vperm.xlu0 %448, %v402
        %v450 = vpop.permute.xlu0 %449
        %452 = vset.pattern.permute.xlu0 1
        %453 = vperm.xlu0 %452, %v403
        %v454 = vpop.permute.xlu0 %453
        %v456 = vsel %vm439, %v442, 0.0
        %v457 = vsel %vm439, %v446, 0.0
        %v458 = vsel %vm439, %v450, 0.0
        %v459 = vsel %vm439, %v454, 0.0
        %v460 = vadd.f32 %v432, %v456
        %v461 = vadd.f32 %v433, %v457
        %v462 = vadd.f32 %v434, %v458
        %v463 = vadd.f32 %v435, %v459
        %vm464 = vcmp.eq.s32.totalorder %v399, 2
        %v465 = vsel %vm464, 1, 0
        %v466 = vperm.slane %v465, 0
        %vm467 = vcmp.eq.s32.totalorder %v466, 1
        %468 = vset.pattern.permute.xlu0 2
        %469 = vperm.xlu0 %468, %v400
        %v470 = vpop.permute.xlu0 %469
        %472 = vset.pattern.permute.xlu0 2
        %473 = vperm.xlu0 %472, %v401
        %v474 = vpop.permute.xlu0 %473
        %476 = vset.pattern.permute.xlu0 2
        %477 = vperm.xlu0 %476, %v402
        %v478 = vpop.permute.xlu0 %477
        %480 = vset.pattern.permute.xlu0 2
        %481 = vperm.xlu0 %480, %v403
        %v482 = vpop.permute.xlu0 %481
        %v484 = vsel %vm467, %v470, 0.0
        %v485 = vsel %vm467, %v474, 0.0
        %v486 = vsel %vm467, %v478, 0.0
        %v487 = vsel %vm467, %v482, 0.0
        %v488 = vadd.f32 %v460, %v484
        %v489 = vadd.f32 %v461, %v485
        %v490 = vadd.f32 %v462, %v486
        %v491 = vadd.f32 %v463, %v487
        %vm492 = vcmp.eq.s32.totalorder %v399, 3
        %v493 = vsel %vm492, 1, 0
        %v494 = vperm.slane %v493, 0
        %vm495 = vcmp.eq.s32.totalorder %v494, 1
        %496 = vset.pattern.permute.xlu0 3
        %497 = vperm.xlu0 %496, %v400
        %v498 = vpop.permute.xlu0 %497
        %500 = vset.pattern.permute.xlu0 3
        %501 = vperm.xlu0 %500, %v401
        %v502 = vpop.permute.xlu0 %501
        %504 = vset.pattern.permute.xlu0 3
        %505 = vperm.xlu0 %504, %v402
        %v506 = vpop.permute.xlu0 %505
        %508 = vset.pattern.permute.xlu0 3
        %509 = vperm.xlu0 %508, %v403
        %v510 = vpop.permute.xlu0 %509
        %v512 = vsel %vm495, %v498, 0.0
        %v513 = vsel %vm495, %v502, 0.0
        %v514 = vsel %vm495, %v506, 0.0
        %v515 = vsel %vm495, %v510, 0.0
        %v516 = vadd.f32 %v488, %v512
        %v517 = vadd.f32 %v489, %v513
        %v518 = vadd.f32 %v490, %v514
        %v519 = vadd.f32 %v491, %v515
        %vm520 = vcmp.eq.s32.totalorder %v399, 4
        %v521 = vsel %vm520, 1, 0
        %v522 = vperm.slane %v521, 0
        %vm523 = vcmp.eq.s32.totalorder %v522, 1
        %524 = vset.pattern.permute.xlu0 4
        %525 = vperm.xlu0 %524, %v400
        %v526 = vpop.permute.xlu0 %525
        %528 = vset.pattern.permute.xlu0 4
        %529 = vperm.xlu0 %528, %v401
        %v530 = vpop.permute.xlu0 %529
        %532 = vset.pattern.permute.xlu0 4
        %533 = vperm.xlu0 %532, %v402
        %v534 = vpop.permute.xlu0 %533
        %536 = vset.pattern.permute.xlu0 4
        %537 = vperm.xlu0 %536, %v403
        %v538 = vpop.permute.xlu0 %537
        %v540 = vsel %vm523, %v526, 0.0
        %v541 = vsel %vm523, %v530, 0.0
        %v542 = vsel %vm523, %v534, 0.0
        %v543 = vsel %vm523, %v538, 0.0
        %v544 = vadd.f32 %v516, %v540
        %v545 = vadd.f32 %v517, %v541
        %v546 = vadd.f32 %v518, %v542
        %v547 = vadd.f32 %v519, %v543
        %vm548 = vcmp.eq.s32.totalorder %v399, 5
        %v549 = vsel %vm548, 1, 0
        %v550 = vperm.slane %v549, 0
        %vm551 = vcmp.eq.s32.totalorder %v550, 1
        %552 = vset.pattern.permute.xlu0 5
        %553 = vperm.xlu0 %552, %v400
        %v554 = vpop.permute.xlu0 %553
        %556 = vset.pattern.permute.xlu0 5
        %557 = vperm.xlu0 %556, %v401
        %v558 = vpop.permute.xlu0 %557
        %560 = vset.pattern.permute.xlu0 5
        %561 = vperm.xlu0 %560, %v402
        %v562 = vpop.permute.xlu0 %561
        %564 = vset.pattern.permute.xlu0 5
        %565 = vperm.xlu0 %564, %v403
        %v566 = vpop.permute.xlu0 %565
        %v568 = vsel %vm551, %v554, 0.0
        %v569 = vsel %vm551, %v558, 0.0
        %v570 = vsel %vm551, %v562, 0.0
        %v571 = vsel %vm551, %v566, 0.0
        %v572 = vadd.f32 %v544, %v568
        %v573 = vadd.f32 %v545, %v569
        %v574 = vadd.f32 %v546, %v570
        %v575 = vadd.f32 %v547, %v571
        %vm576 = vcmp.eq.s32.totalorder %v399, 6
        %v577 = vsel %vm576, 1, 0
        %v578 = vperm.slane %v577, 0
        %vm579 = vcmp.eq.s32.totalorder %v578, 1
        %580 = vset.pattern.permute.xlu0 6
        %581 = vperm.xlu0 %580, %v400
        %v582 = vpop.permute.xlu0 %581
        %584 = vset.pattern.permute.xlu0 6
        %585 = vperm.xlu0 %584, %v401
        %v586 = vpop.permute.xlu0 %585
        %588 = vset.pattern.permute.xlu0 6
        %589 = vperm.xlu0 %588, %v402
        %v590 = vpop.permute.xlu0 %589
        %592 = vset.pattern.permute.xlu0 6
        %593 = vperm.xlu0 %592, %v403
        %v594 = vpop.permute.xlu0 %593
        %v596 = vsel %vm579, %v582, 0.0
        %v597 = vsel %vm579, %v586, 0.0
        %v598 = vsel %vm579, %v590, 0.0
        %v599 = vsel %vm579, %v594, 0.0
        %v600 = vadd.f32 %v572, %v596
        %v601 = vadd.f32 %v573, %v597
        %v602 = vadd.f32 %v574, %v598
        %v603 = vadd.f32 %v575, %v599
        %vm604 = vcmp.eq.s32.totalorder %v399, 7
        %v605 = vsel %vm604, 1, 0
        %v606 = vperm.slane %v605, 0
        %vm607 = vcmp.eq.s32.totalorder %v606, 1
        %608 = vset.pattern.permute.xlu0 7
        %609 = vperm.xlu0 %608, %v400
        %v610 = vpop.permute.xlu0 %609
        %612 = vset.pattern.permute.xlu0 7
        %613 = vperm.xlu0 %612, %v401
        %v614 = vpop.permute.xlu0 %613
        %616 = vset.pattern.permute.xlu0 7
        %617 = vperm.xlu0 %616, %v402
        %v618 = vpop.permute.xlu0 %617
        %620 = vset.pattern.permute.xlu0 7
        %621 = vperm.xlu0 %620, %v403
        %v622 = vpop.permute.xlu0 %621
        %v624 = vsel %vm607, %v610, 0.0
        %v625 = vsel %vm607, %v614, 0.0
        %v626 = vsel %vm607, %v618, 0.0
        %v627 = vsel %vm607, %v622, 0.0
        %v628 = vadd.f32 %v600, %v624
        %v629 = vadd.f32 %v601, %v625
        %v630 = vadd.f32 %v602, %v626
        %v631 = vadd.f32 %v603, %v627
        %vm632 = vcmp.eq.s32.totalorder %v399, 8
        %v633 = vsel %vm632, 1, 0
        %v634 = vperm.slane %v633, 0
        %vm635 = vcmp.eq.s32.totalorder %v634, 1
        %636 = vset.pattern.permute.xlu0 8
        %637 = vperm.xlu0 %636, %v400
        %v638 = vpop.permute.xlu0 %637
        %640 = vset.pattern.permute.xlu0 8
        %641 = vperm.xlu0 %640, %v401
        %v642 = vpop.permute.xlu0 %641
        %644 = vset.pattern.permute.xlu0 8
        %645 = vperm.xlu0 %644, %v402
        %v646 = vpop.permute.xlu0 %645
        %648 = vset.pattern.permute.xlu0 8
        %649 = vperm.xlu0 %648, %v403
        %v650 = vpop.permute.xlu0 %649
        %v652 = vsel %vm635, %v638, 0.0
        %v653 = vsel %vm635, %v642, 0.0
        %v654 = vsel %vm635, %v646, 0.0
        %v655 = vsel %vm635, %v650, 0.0
        %v656 = vadd.f32 %v628, %v652
        %v657 = vadd.f32 %v629, %v653
        %v658 = vadd.f32 %v630, %v654
        %v659 = vadd.f32 %v631, %v655
        %vm660 = vcmp.eq.s32.totalorder %v399, 9
        %v661 = vsel %vm660, 1, 0
        %v662 = vperm.slane %v661, 0
        %vm663 = vcmp.eq.s32.totalorder %v662, 1
        %664 = vset.pattern.permute.xlu0 9
        %665 = vperm.xlu0 %664, %v400
        %v666 = vpop.permute.xlu0 %665
        %668 = vset.pattern.permute.xlu0 9
        %669 = vperm.xlu0 %668, %v401
        %v670 = vpop.permute.xlu0 %669
        %672 = vset.pattern.permute.xlu0 9
        %673 = vperm.xlu0 %672, %v402
        %v674 = vpop.permute.xlu0 %673
        %676 = vset.pattern.permute.xlu0 9
        %677 = vperm.xlu0 %676, %v403
        %v678 = vpop.permute.xlu0 %677
        %v680 = vsel %vm663, %v666, 0.0
        %v681 = vsel %vm663, %v670, 0.0
        %v682 = vsel %vm663, %v674, 0.0
        %v683 = vsel %vm663, %v678, 0.0
        %v684 = vadd.f32 %v656, %v680
        %v685 = vadd.f32 %v657, %v681
        %v686 = vadd.f32 %v658, %v682
        %v687 = vadd.f32 %v659, %v683
        %vm688 = vcmp.eq.s32.totalorder %v399, 10
        %v689 = vsel %vm688, 1, 0
        %v690 = vperm.slane %v689, 0
        %vm691 = vcmp.eq.s32.totalorder %v690, 1
        %692 = vset.pattern.permute.xlu0 10
        %693 = vperm.xlu0 %692, %v400
        %v694 = vpop.permute.xlu0 %693
        %696 = vset.pattern.permute.xlu0 10
        %697 = vperm.xlu0 %696, %v401
        %v698 = vpop.permute.xlu0 %697
        %700 = vset.pattern.permute.xlu0 10
        %701 = vperm.xlu0 %700, %v402
        %v702 = vpop.permute.xlu0 %701
        %704 = vset.pattern.permute.xlu0 10
        %705 = vperm.xlu0 %704, %v403
        %v706 = vpop.permute.xlu0 %705
        %v708 = vsel %vm691, %v694, 0.0
        %v709 = vsel %vm691, %v698, 0.0
        %v710 = vsel %vm691, %v702, 0.0
        %v711 = vsel %vm691, %v706, 0.0
        %v712 = vadd.f32 %v684, %v708
        %v713 = vadd.f32 %v685, %v709
        %v714 = vadd.f32 %v686, %v710
        %v715 = vadd.f32 %v687, %v711
        %vm716 = vcmp.eq.s32.totalorder %v399, 11
        %v717 = vsel %vm716, 1, 0
        %v718 = vperm.slane %v717, 0
        %vm719 = vcmp.eq.s32.totalorder %v718, 1
        %720 = vset.pattern.permute.xlu0 11
        %721 = vperm.xlu0 %720, %v400
        %v722 = vpop.permute.xlu0 %721
        %724 = vset.pattern.permute.xlu0 11
        %725 = vperm.xlu0 %724, %v401
        %v726 = vpop.permute.xlu0 %725
        %728 = vset.pattern.permute.xlu0 11
        %729 = vperm.xlu0 %728, %v402
        %v730 = vpop.permute.xlu0 %729
        %732 = vset.pattern.permute.xlu0 11
        %733 = vperm.xlu0 %732, %v403
        %v734 = vpop.permute.xlu0 %733
        %v736 = vsel %vm719, %v722, 0.0
        %v737 = vsel %vm719, %v726, 0.0
        %v738 = vsel %vm719, %v730, 0.0
        %v739 = vsel %vm719, %v734, 0.0
        %v740 = vadd.f32 %v712, %v736
        %v741 = vadd.f32 %v713, %v737
        %v742 = vadd.f32 %v714, %v738
        %v743 = vadd.f32 %v715, %v739
        %vm744 = vcmp.eq.s32.totalorder %v399, 12
        %v745 = vsel %vm744, 1, 0
        %v746 = vperm.slane %v745, 0
        %vm747 = vcmp.eq.s32.totalorder %v746, 1
        %748 = vset.pattern.permute.xlu0 12
        %749 = vperm.xlu0 %748, %v400
        %v750 = vpop.permute.xlu0 %749
        %752 = vset.pattern.permute.xlu0 12
        %753 = vperm.xlu0 %752, %v401
        %v754 = vpop.permute.xlu0 %753
        %756 = vset.pattern.permute.xlu0 12
        %757 = vperm.xlu0 %756, %v402
        %v758 = vpop.permute.xlu0 %757
        %760 = vset.pattern.permute.xlu0 12
        %761 = vperm.xlu0 %760, %v403
        %v762 = vpop.permute.xlu0 %761
        %v764 = vsel %vm747, %v750, 0.0
        %v765 = vsel %vm747, %v754, 0.0
        %v766 = vsel %vm747, %v758, 0.0
        %v767 = vsel %vm747, %v762, 0.0
        %v768 = vadd.f32 %v740, %v764
        %v769 = vadd.f32 %v741, %v765
        %v770 = vadd.f32 %v742, %v766
        %v771 = vadd.f32 %v743, %v767
        %vm772 = vcmp.eq.s32.totalorder %v399, 13
        %v773 = vsel %vm772, 1, 0
        %v774 = vperm.slane %v773, 0
        %vm775 = vcmp.eq.s32.totalorder %v774, 1
        %776 = vset.pattern.permute.xlu0 13
        %777 = vperm.xlu0 %776, %v400
        %v778 = vpop.permute.xlu0 %777
        %780 = vset.pattern.permute.xlu0 13
        %781 = vperm.xlu0 %780, %v401
        %v782 = vpop.permute.xlu0 %781
        %784 = vset.pattern.permute.xlu0 13
        %785 = vperm.xlu0 %784, %v402
        %v786 = vpop.permute.xlu0 %785
        %788 = vset.pattern.permute.xlu0 13
        %789 = vperm.xlu0 %788, %v403
        %v790 = vpop.permute.xlu0 %789
        %v792 = vsel %vm775, %v778, 0.0
        %v793 = vsel %vm775, %v782, 0.0
        %v794 = vsel %vm775, %v786, 0.0
        %v795 = vsel %vm775, %v790, 0.0
        %v796 = vadd.f32 %v768, %v792
        %v797 = vadd.f32 %v769, %v793
        %v798 = vadd.f32 %v770, %v794
        %v799 = vadd.f32 %v771, %v795
        %vm800 = vcmp.eq.s32.totalorder %v399, 14
        %v801 = vsel %vm800, 1, 0
        %v802 = vperm.slane %v801, 0
        %vm803 = vcmp.eq.s32.totalorder %v802, 1
        %804 = vset.pattern.permute.xlu0 14
        %805 = vperm.xlu0 %804, %v400
        %v806 = vpop.permute.xlu0 %805
        %808 = vset.pattern.permute.xlu0 14
        %809 = vperm.xlu0 %808, %v401
        %v810 = vpop.permute.xlu0 %809
        %812 = vset.pattern.permute.xlu0 14
        %813 = vperm.xlu0 %812, %v402
        %v814 = vpop.permute.xlu0 %813
        %816 = vset.pattern.permute.xlu0 14
        %817 = vperm.xlu0 %816, %v403
        %v818 = vpop.permute.xlu0 %817
        %v820 = vsel %vm803, %v806, 0.0
        %v821 = vsel %vm803, %v810, 0.0
        %v822 = vsel %vm803, %v814, 0.0
        %v823 = vsel %vm803, %v818, 0.0
        %v824 = vadd.f32 %v796, %v820
        %v825 = vadd.f32 %v797, %v821
        %v826 = vadd.f32 %v798, %v822
        %v827 = vadd.f32 %v799, %v823
        %vm828 = vcmp.eq.s32.totalorder %v399, 15
        %v829 = vsel %vm828, 1, 0
        %v830 = vperm.slane %v829, 0
        %vm831 = vcmp.eq.s32.totalorder %v830, 1
        %832 = vset.pattern.permute.xlu0 15
        %833 = vperm.xlu0 %832, %v400
        %v834 = vpop.permute.xlu0 %833
        %836 = vset.pattern.permute.xlu0 15
        %837 = vperm.xlu0 %836, %v401
        %v838 = vpop.permute.xlu0 %837
        %840 = vset.pattern.permute.xlu0 15
        %841 = vperm.xlu0 %840, %v402
        %v842 = vpop.permute.xlu0 %841
        %844 = vset.pattern.permute.xlu0 15
        %845 = vperm.xlu0 %844, %v403
        %v846 = vpop.permute.xlu0 %845
        %v848 = vsel %vm831, %v834, 0.0
        %v849 = vsel %vm831, %v838, 0.0
        %v850 = vsel %vm831, %v842, 0.0
        %v851 = vsel %vm831, %v846, 0.0
        %v852 = vadd.f32 %v824, %v848
        %v853 = vadd.f32 %v825, %v849
        %v854 = vadd.f32 %v826, %v850
        %v855 = vadd.f32 %v827, %v851
        %vm856 = vcmp.eq.s32.totalorder %v399, 16
        %v857 = vsel %vm856, 1, 0
        %v858 = vperm.slane %v857, 0
        %vm859 = vcmp.eq.s32.totalorder %v858, 1
        %860 = vset.pattern.permute.xlu0 16
        %861 = vperm.xlu0 %860, %v400
        %v862 = vpop.permute.xlu0 %861
        %864 = vset.pattern.permute.xlu0 16
        %865 = vperm.xlu0 %864, %v401
        %v866 = vpop.permute.xlu0 %865
        %868 = vset.pattern.permute.xlu0 16
        %869 = vperm.xlu0 %868, %v402
        %v870 = vpop.permute.xlu0 %869
        %872 = vset.pattern.permute.xlu0 16
        %873 = vperm.xlu0 %872, %v403
        %v874 = vpop.permute.xlu0 %873
        %v876 = vsel %vm859, %v862, 0.0
        %v877 = vsel %vm859, %v866, 0.0
        %v878 = vsel %vm859, %v870, 0.0
        %v879 = vsel %vm859, %v874, 0.0
        %v880 = vadd.f32 %v852, %v876
        %v881 = vadd.f32 %v853, %v877
        %v882 = vadd.f32 %v854, %v878
        %v883 = vadd.f32 %v855, %v879
        %vm884 = vcmp.eq.s32.totalorder %v399, 17
        %v885 = vsel %vm884, 1, 0
        %v886 = vperm.slane %v885, 0
        %vm887 = vcmp.eq.s32.totalorder %v886, 1
        %888 = vset.pattern.permute.xlu0 17
        %889 = vperm.xlu0 %888, %v400
        %v890 = vpop.permute.xlu0 %889
        %892 = vset.pattern.permute.xlu0 17
        %893 = vperm.xlu0 %892, %v401
        %v894 = vpop.permute.xlu0 %893
        %896 = vset.pattern.permute.xlu0 17
        %897 = vperm.xlu0 %896, %v402
        %v898 = vpop.permute.xlu0 %897
        %900 = vset.pattern.permute.xlu0 17
        %901 = vperm.xlu0 %900, %v403
        %v902 = vpop.permute.xlu0 %901
        %v904 = vsel %vm887, %v890, 0.0
        %v905 = vsel %vm887, %v894, 0.0
        %v906 = vsel %vm887, %v898, 0.0
        %v907 = vsel %vm887, %v902, 0.0
        %v908 = vadd.f32 %v880, %v904
        %v909 = vadd.f32 %v881, %v905
        %v910 = vadd.f32 %v882, %v906
        %v911 = vadd.f32 %v883, %v907
        %vm912 = vcmp.eq.s32.totalorder %v399, 18
        %v913 = vsel %vm912, 1, 0
        %v914 = vperm.slane %v913, 0
        %vm915 = vcmp.eq.s32.totalorder %v914, 1
        %916 = vset.pattern.permute.xlu0 18
        %917 = vperm.xlu0 %916, %v400
        %v918 = vpop.permute.xlu0 %917
        %920 = vset.pattern.permute.xlu0 18
        %921 = vperm.xlu0 %920, %v401
        %v922 = vpop.permute.xlu0 %921
        %924 = vset.pattern.permute.xlu0 18
        %925 = vperm.xlu0 %924, %v402
        %v926 = vpop.permute.xlu0 %925
        %928 = vset.pattern.permute.xlu0 18
        %929 = vperm.xlu0 %928, %v403
        %v930 = vpop.permute.xlu0 %929
        %v932 = vsel %vm915, %v918, 0.0
        %v933 = vsel %vm915, %v922, 0.0
        %v934 = vsel %vm915, %v926, 0.0
        %v935 = vsel %vm915, %v930, 0.0
        %v936 = vadd.f32 %v908, %v932
        %v937 = vadd.f32 %v909, %v933
        %v938 = vadd.f32 %v910, %v934
        %v939 = vadd.f32 %v911, %v935
        %vm940 = vcmp.eq.s32.totalorder %v399, 19
        %v941 = vsel %vm940, 1, 0
        %v942 = vperm.slane %v941, 0
        %vm943 = vcmp.eq.s32.totalorder %v942, 1
        %944 = vset.pattern.permute.xlu0 19
        %945 = vperm.xlu0 %944, %v400
        %v946 = vpop.permute.xlu0 %945
        %948 = vset.pattern.permute.xlu0 19
        %949 = vperm.xlu0 %948, %v401
        %v950 = vpop.permute.xlu0 %949
        %952 = vset.pattern.permute.xlu0 19
        %953 = vperm.xlu0 %952, %v402
        %v954 = vpop.permute.xlu0 %953
        %956 = vset.pattern.permute.xlu0 19
        %957 = vperm.xlu0 %956, %v403
        %v958 = vpop.permute.xlu0 %957
        %v960 = vsel %vm943, %v946, 0.0
        %v961 = vsel %vm943, %v950, 0.0
        %v962 = vsel %vm943, %v954, 0.0
        %v963 = vsel %vm943, %v958, 0.0
        %v964 = vadd.f32 %v936, %v960
        %v965 = vadd.f32 %v937, %v961
        %v966 = vadd.f32 %v938, %v962
        %v967 = vadd.f32 %v939, %v963
        %v968 = vld [vmem:[%s2] sm:$0xff]
        %v969 = vld [vmem:[%s2 + $0x8] sm:$0xff]
        %v970 = vld [vmem:[%s2 + $0x10] sm:$0xff]
        %v971 = vld [vmem:[%s2 + $0x18] sm:$0xff]
        %v972 = vperm.slane %v405, 1
        %vm973 = vcmp.eq.s32.totalorder %v972, 1
        %975 = vset.pattern.permute.xlu0 0
        %976 = vperm.xlu0 %975, %v968
        %v977 = vpop.permute.xlu0 %976
        %980 = vset.pattern.permute.xlu0 0
        %981 = vperm.xlu0 %980, %v969
        %v982 = vpop.permute.xlu0 %981
        %985 = vset.pattern.permute.xlu0 0
        %986 = vperm.xlu0 %985, %v970
        %v987 = vpop.permute.xlu0 %986
        %990 = vset.pattern.permute.xlu0 0
        %991 = vperm.xlu0 %990, %v971
        %v992 = vpop.permute.xlu0 %991
        %v994 = vsel %vm973, %v977, 0.0
        %v995 = vsel %vm973, %v982, 0.0
        %v996 = vsel %vm973, %v987, 0.0
        %v997 = vsel %vm973, %v992, 0.0
        %v998 = vadd.f32 %v994, 0.0
        %v999 = vadd.f32 %v995, 0.0
        %v1000 = vadd.f32 %v996, 0.0
        %v1001 = vadd.f32 %v997, 0.0
        %v1002 = vperm.slane %v437, 1
        %vm1003 = vcmp.eq.s32.totalorder %v1002, 1
        %1004 = vset.pattern.permute.xlu0 1
        %1005 = vperm.xlu0 %1004, %v968
        %v1006 = vpop.permute.xlu0 %1005
        %1008 = vset.pattern.permute.xlu0 1
        %1009 = vperm.xlu0 %1008, %v969
        %v1010 = vpop.permute.xlu0 %1009
        %1012 = vset.pattern.permute.xlu0 1
        %1013 = vperm.xlu0 %1012, %v970
        %v1014 = vpop.permute.xlu0 %1013
        %1016 = vset.pattern.permute.xlu0 1
        %1017 = vperm.xlu0 %1016, %v971
        %v1018 = vpop.permute.xlu0 %1017
        %v1020 = vsel %vm1003, %v1006, 0.0
        %v1021 = vsel %vm1003, %v1010, 0.0
        %v1022 = vsel %vm1003, %v1014, 0.0
        %v1023 = vsel %vm1003, %v1018, 0.0
        %v1024 = vadd.f32 %v998, %v1020
        %v1025 = vadd.f32 %v999, %v1021
        %v1026 = vadd.f32 %v1000, %v1022
        %v1027 = vadd.f32 %v1001, %v1023
        %v1028 = vperm.slane %v465, 1
        %vm1029 = vcmp.eq.s32.totalorder %v1028, 1
        %1030 = vset.pattern.permute.xlu0 2
        %1031 = vperm.xlu0 %1030, %v968
        %v1032 = vpop.permute.xlu0 %1031
        %1034 = vset.pattern.permute.xlu0 2
        %1035 = vperm.xlu0 %1034, %v969
        %v1036 = vpop.permute.xlu0 %1035
        %1038 = vset.pattern.permute.xlu0 2
        %1039 = vperm.xlu0 %1038, %v970
        %v1040 = vpop.permute.xlu0 %1039
        %1042 = vset.pattern.permute.xlu0 2
        %1043 = vperm.xlu0 %1042, %v971
        %v1044 = vpop.permute.xlu0 %1043
        %v1046 = vsel %vm1029, %v1032, 0.0
        %v1047 = vsel %vm1029, %v1036, 0.0
        %v1048 = vsel %vm1029, %v1040, 0.0
        %v1049 = vsel %vm1029, %v1044, 0.0
        %v1050 = vadd.f32 %v1024, %v1046
        %v1051 = vadd.f32 %v1025, %v1047
        %v1052 = vadd.f32 %v1026, %v1048
        %v1053 = vadd.f32 %v1027, %v1049
        %v1054 = vperm.slane %v493, 1
        %vm1055 = vcmp.eq.s32.totalorder %v1054, 1
        %1056 = vset.pattern.permute.xlu0 3
        %1057 = vperm.xlu0 %1056, %v968
        %v1058 = vpop.permute.xlu0 %1057
        %1060 = vset.pattern.permute.xlu0 3
        %1061 = vperm.xlu0 %1060, %v969
        %v1062 = vpop.permute.xlu0 %1061
        %1064 = vset.pattern.permute.xlu0 3
        %1065 = vperm.xlu0 %1064, %v970
        %v1066 = vpop.permute.xlu0 %1065
        %1068 = vset.pattern.permute.xlu0 3
        %1069 = vperm.xlu0 %1068, %v971
        %v1070 = vpop.permute.xlu0 %1069
        %v1072 = vsel %vm1055, %v1058, 0.0
        %v1073 = vsel %vm1055, %v1062, 0.0
        %v1074 = vsel %vm1055, %v1066, 0.0
        %v1075 = vsel %vm1055, %v1070, 0.0
        %v1076 = vadd.f32 %v1050, %v1072
        %v1077 = vadd.f32 %v1051, %v1073
        %v1078 = vadd.f32 %v1052, %v1074
        %v1079 = vadd.f32 %v1053, %v1075
        %v1080 = vperm.slane %v521, 1
        %vm1081 = vcmp.eq.s32.totalorder %v1080, 1
        %1082 = vset.pattern.permute.xlu0 4
        %1083 = vperm.xlu0 %1082, %v968
        %v1084 = vpop.permute.xlu0 %1083
        %1086 = vset.pattern.permute.xlu0 4
        %1087 = vperm.xlu0 %1086, %v969
        %v1088 = vpop.permute.xlu0 %1087
        %1090 = vset.pattern.permute.xlu0 4
        %1091 = vperm.xlu0 %1090, %v970
        %v1092 = vpop.permute.xlu0 %1091
        %1094 = vset.pattern.permute.xlu0 4
        %1095 = vperm.xlu0 %1094, %v971
        %v1096 = vpop.permute.xlu0 %1095
        %v1098 = vsel %vm1081, %v1084, 0.0
        %v1099 = vsel %vm1081, %v1088, 0.0
        %v1100 = vsel %vm1081, %v1092, 0.0
        %v1101 = vsel %vm1081, %v1096, 0.0
        %v1102 = vadd.f32 %v1076, %v1098
        %v1103 = vadd.f32 %v1077, %v1099
        %v1104 = vadd.f32 %v1078, %v1100
        %v1105 = vadd.f32 %v1079, %v1101
        %v1106 = vperm.slane %v549, 1
        %vm1107 = vcmp.eq.s32.totalorder %v1106, 1
        %1108 = vset.pattern.permute.xlu0 5
        %1109 = vperm.xlu0 %1108, %v968
        %v1110 = vpop.permute.xlu0 %1109
        %1112 = vset.pattern.permute.xlu0 5
        %1113 = vperm.xlu0 %1112, %v969
        %v1114 = vpop.permute.xlu0 %1113
        %1116 = vset.pattern.permute.xlu0 5
        %1117 = vperm.xlu0 %1116, %v970
        %v1118 = vpop.permute.xlu0 %1117
        %1120 = vset.pattern.permute.xlu0 5
        %1121 = vperm.xlu0 %1120, %v971
        %v1122 = vpop.permute.xlu0 %1121
        %v1124 = vsel %vm1107, %v1110, 0.0
        %v1125 = vsel %vm1107, %v1114, 0.0
        %v1126 = vsel %vm1107, %v1118, 0.0
        %v1127 = vsel %vm1107, %v1122, 0.0
        %v1128 = vadd.f32 %v1102, %v1124
        %v1129 = vadd.f32 %v1103, %v1125
        %v1130 = vadd.f32 %v1104, %v1126
        %v1131 = vadd.f32 %v1105, %v1127
        %v1132 = vperm.slane %v577, 1
        %vm1133 = vcmp.eq.s32.totalorder %v1132, 1
        %1134 = vset.pattern.permute.xlu0 6
        %1135 = vperm.xlu0 %1134, %v968
        %v1136 = vpop.permute.xlu0 %1135
        %1138 = vset.pattern.permute.xlu0 6
        %1139 = vperm.xlu0 %1138, %v969
        %v1140 = vpop.permute.xlu0 %1139
        %1142 = vset.pattern.permute.xlu0 6
        %1143 = vperm.xlu0 %1142, %v970
        %v1144 = vpop.permute.xlu0 %1143
        %1146 = vset.pattern.permute.xlu0 6
        %1147 = vperm.xlu0 %1146, %v971
        %v1148 = vpop.permute.xlu0 %1147
        %v1150 = vsel %vm1133, %v1136, 0.0
        %v1151 = vsel %vm1133, %v1140, 0.0
        %v1152 = vsel %vm1133, %v1144, 0.0
        %v1153 = vsel %vm1133, %v1148, 0.0
        %v1154 = vadd.f32 %v1128, %v1150
        %v1155 = vadd.f32 %v1129, %v1151
        %v1156 = vadd.f32 %v1130, %v1152
        %v1157 = vadd.f32 %v1131, %v1153
        %v1158 = vperm.slane %v605, 1
        %vm1159 = vcmp.eq.s32.totalorder %v1158, 1
        %1160 = vset.pattern.permute.xlu0 7
        %1161 = vperm.xlu0 %1160, %v968
        %v1162 = vpop.permute.xlu0 %1161
        %1164 = vset.pattern.permute.xlu0 7
        %1165 = vperm.xlu0 %1164, %v969
        %v1166 = vpop.permute.xlu0 %1165
        %1168 = vset.pattern.permute.xlu0 7
        %1169 = vperm.xlu0 %1168, %v970
        %v1170 = vpop.permute.xlu0 %1169
        %1172 = vset.pattern.permute.xlu0 7
        %1173 = vperm.xlu0 %1172, %v971
        %v1174 = vpop.permute.xlu0 %1173
        %v1176 = vsel %vm1159, %v1162, 0.0
        %v1177 = vsel %vm1159, %v1166, 0.0
        %v1178 = vsel %vm1159, %v1170, 0.0
        %v1179 = vsel %vm1159, %v1174, 0.0
        %v1180 = vadd.f32 %v1154, %v1176
        %v1181 = vadd.f32 %v1155, %v1177
        %v1182 = vadd.f32 %v1156, %v1178
        %v1183 = vadd.f32 %v1157, %v1179
        %v1184 = vperm.slane %v633, 1
        %vm1185 = vcmp.eq.s32.totalorder %v1184, 1
        %1186 = vset.pattern.permute.xlu0 8
        %1187 = vperm.xlu0 %1186, %v968
        %v1188 = vpop.permute.xlu0 %1187
        %1190 = vset.pattern.permute.xlu0 8
        %1191 = vperm.xlu0 %1190, %v969
        %v1192 = vpop.permute.xlu0 %1191
        %1194 = vset.pattern.permute.xlu0 8
        %1195 = vperm.xlu0 %1194, %v970
        %v1196 = vpop.permute.xlu0 %1195
        %1198 = vset.pattern.permute.xlu0 8
        %1199 = vperm.xlu0 %1198, %v971
        %v1200 = vpop.permute.xlu0 %1199
        %v1202 = vsel %vm1185, %v1188, 0.0
        %v1203 = vsel %vm1185, %v1192, 0.0
        %v1204 = vsel %vm1185, %v1196, 0.0
        %v1205 = vsel %vm1185, %v1200, 0.0
        %v1206 = vadd.f32 %v1180, %v1202
        %v1207 = vadd.f32 %v1181, %v1203
        %v1208 = vadd.f32 %v1182, %v1204
        %v1209 = vadd.f32 %v1183, %v1205
        %v1210 = vperm.slane %v661, 1
        %vm1211 = vcmp.eq.s32.totalorder %v1210, 1
        %1212 = vset.pattern.permute.xlu0 9
        %1213 = vperm.xlu0 %1212, %v968
        %v1214 = vpop.permute.xlu0 %1213
        %1216 = vset.pattern.permute.xlu0 9
        %1217 = vperm.xlu0 %1216, %v969
        %v1218 = vpop.permute.xlu0 %1217
        %1220 = vset.pattern.permute.xlu0 9
        %1221 = vperm.xlu0 %1220, %v970
        %v1222 = vpop.permute.xlu0 %1221
        %1224 = vset.pattern.permute.xlu0 9
        %1225 = vperm.xlu0 %1224, %v971
        %v1226 = vpop.permute.xlu0 %1225
        %v1228 = vsel %vm1211, %v1214, 0.0
        %v1229 = vsel %vm1211, %v1218, 0.0
        %v1230 = vsel %vm1211, %v1222, 0.0
        %v1231 = vsel %vm1211, %v1226, 0.0
        %v1232 = vadd.f32 %v1206, %v1228
        %v1233 = vadd.f32 %v1207, %v1229
        %v1234 = vadd.f32 %v1208, %v1230
        %v1235 = vadd.f32 %v1209, %v1231
        %v1236 = vperm.slane %v689, 1
        %vm1237 = vcmp.eq.s32.totalorder %v1236, 1
        %1238 = vset.pattern.permute.xlu0 10
        %1239 = vperm.xlu0 %1238, %v968
        %v1240 = vpop.permute.xlu0 %1239
        %1242 = vset.pattern.permute.xlu0 10
        %1243 = vperm.xlu0 %1242, %v969
        %v1244 = vpop.permute.xlu0 %1243
        %1246 = vset.pattern.permute.xlu0 10
        %1247 = vperm.xlu0 %1246, %v970
        %v1248 = vpop.permute.xlu0 %1247
        %1250 = vset.pattern.permute.xlu0 10
        %1251 = vperm.xlu0 %1250, %v971
        %v1252 = vpop.permute.xlu0 %1251
        %v1254 = vsel %vm1237, %v1240, 0.0
        %v1255 = vsel %vm1237, %v1244, 0.0
        %v1256 = vsel %vm1237, %v1248, 0.0
        %v1257 = vsel %vm1237, %v1252, 0.0
        %v1258 = vadd.f32 %v1232, %v1254
        %v1259 = vadd.f32 %v1233, %v1255
        %v1260 = vadd.f32 %v1234, %v1256
        %v1261 = vadd.f32 %v1235, %v1257
        %v1262 = vperm.slane %v717, 1
        %vm1263 = vcmp.eq.s32.totalorder %v1262, 1
        %1264 = vset.pattern.permute.xlu0 11
        %1265 = vperm.xlu0 %1264, %v968
        %v1266 = vpop.permute.xlu0 %1265
        %1268 = vset.pattern.permute.xlu0 11
        %1269 = vperm.xlu0 %1268, %v969
        %v1270 = vpop.permute.xlu0 %1269
        %1272 = vset.pattern.permute.xlu0 11
        %1273 = vperm.xlu0 %1272, %v970
        %v1274 = vpop.permute.xlu0 %1273
        %1276 = vset.pattern.permute.xlu0 11
        %1277 = vperm.xlu0 %1276, %v971
        %v1278 = vpop.permute.xlu0 %1277
        %v1280 = vsel %vm1263, %v1266, 0.0
        %v1281 = vsel %vm1263, %v1270, 0.0
        %v1282 = vsel %vm1263, %v1274, 0.0
        %v1283 = vsel %vm1263, %v1278, 0.0
        %v1284 = vadd.f32 %v1258, %v1280
        %v1285 = vadd.f32 %v1259, %v1281
        %v1286 = vadd.f32 %v1260, %v1282
        %v1287 = vadd.f32 %v1261, %v1283
        %v1288 = vperm.slane %v745, 1
        %vm1289 = vcmp.eq.s32.totalorder %v1288, 1
        %1290 = vset.pattern.permute.xlu0 12
        %1291 = vperm.xlu0 %1290, %v968
        %v1292 = vpop.permute.xlu0 %1291
        %1294 = vset.pattern.permute.xlu0 12
        %1295 = vperm.xlu0 %1294, %v969
        %v1296 = vpop.permute.xlu0 %1295
        %1298 = vset.pattern.permute.xlu0 12
        %1299 = vperm.xlu0 %1298, %v970
        %v1300 = vpop.permute.xlu0 %1299
        %1302 = vset.pattern.permute.xlu0 12
        %1303 = vperm.xlu0 %1302, %v971
        %v1304 = vpop.permute.xlu0 %1303
        %v1306 = vsel %vm1289, %v1292, 0.0
        %v1307 = vsel %vm1289, %v1296, 0.0
        %v1308 = vsel %vm1289, %v1300, 0.0
        %v1309 = vsel %vm1289, %v1304, 0.0
        %v1310 = vadd.f32 %v1284, %v1306
        %v1311 = vadd.f32 %v1285, %v1307
        %v1312 = vadd.f32 %v1286, %v1308
        %v1313 = vadd.f32 %v1287, %v1309
        %v1314 = vperm.slane %v773, 1
        %vm1315 = vcmp.eq.s32.totalorder %v1314, 1
        %1316 = vset.pattern.permute.xlu0 13
        %1317 = vperm.xlu0 %1316, %v968
        %v1318 = vpop.permute.xlu0 %1317
        %1320 = vset.pattern.permute.xlu0 13
        %1321 = vperm.xlu0 %1320, %v969
        %v1322 = vpop.permute.xlu0 %1321
        %1324 = vset.pattern.permute.xlu0 13
        %1325 = vperm.xlu0 %1324, %v970
        %v1326 = vpop.permute.xlu0 %1325
        %1328 = vset.pattern.permute.xlu0 13
        %1329 = vperm.xlu0 %1328, %v971
        %v1330 = vpop.permute.xlu0 %1329
        %v1332 = vsel %vm1315, %v1318, 0.0
        %v1333 = vsel %vm1315, %v1322, 0.0
        %v1334 = vsel %vm1315, %v1326, 0.0
        %v1335 = vsel %vm1315, %v1330, 0.0
        %v1336 = vadd.f32 %v1310, %v1332
        %v1337 = vadd.f32 %v1311, %v1333
        %v1338 = vadd.f32 %v1312, %v1334
        %v1339 = vadd.f32 %v1313, %v1335
        %v1340 = vperm.slane %v801, 1
        %vm1341 = vcmp.eq.s32.totalorder %v1340, 1
        %1342 = vset.pattern.permute.xlu0 14
        %1343 = vperm.xlu0 %1342, %v968
        %v1344 = vpop.permute.xlu0 %1343
        %1346 = vset.pattern.permute.xlu0 14
        %1347 = vperm.xlu0 %1346, %v969
        %v1348 = vpop.permute.xlu0 %1347
        %1350 = vset.pattern.permute.xlu0 14
        %1351 = vperm.xlu0 %1350, %v970
        %v1352 = vpop.permute.xlu0 %1351
        %1354 = vset.pattern.permute.xlu0 14
        %1355 = vperm.xlu0 %1354, %v971
        %v1356 = vpop.permute.xlu0 %1355
        %v1358 = vsel %vm1341, %v1344, 0.0
        %v1359 = vsel %vm1341, %v1348, 0.0
        %v1360 = vsel %vm1341, %v1352, 0.0
        %v1361 = vsel %vm1341, %v1356, 0.0
        %v1362 = vadd.f32 %v1336, %v1358
        %v1363 = vadd.f32 %v1337, %v1359
        %v1364 = vadd.f32 %v1338, %v1360
        %v1365 = vadd.f32 %v1339, %v1361
        %v1366 = vperm.slane %v829, 1
        %vm1367 = vcmp.eq.s32.totalorder %v1366, 1
        %1368 = vset.pattern.permute.xlu0 15
        %1369 = vperm.xlu0 %1368, %v968
        %v1370 = vpop.permute.xlu0 %1369
        %1372 = vset.pattern.permute.xlu0 15
        %1373 = vperm.xlu0 %1372, %v969
        %v1374 = vpop.permute.xlu0 %1373
        %1376 = vset.pattern.permute.xlu0 15
        %1377 = vperm.xlu0 %1376, %v970
        %v1378 = vpop.permute.xlu0 %1377
        %1380 = vset.pattern.permute.xlu0 15
        %1381 = vperm.xlu0 %1380, %v971
        %v1382 = vpop.permute.xlu0 %1381
        %v1384 = vsel %vm1367, %v1370, 0.0
        %v1385 = vsel %vm1367, %v1374, 0.0
        %v1386 = vsel %vm1367, %v1378, 0.0
        %v1387 = vsel %vm1367, %v1382, 0.0
        %v1388 = vadd.f32 %v1362, %v1384
        %v1389 = vadd.f32 %v1363, %v1385
        %v1390 = vadd.f32 %v1364, %v1386
        %v1391 = vadd.f32 %v1365, %v1387
        %v1392 = vperm.slane %v857, 1
        %vm1393 = vcmp.eq.s32.totalorder %v1392, 1
        %1394 = vset.pattern.permute.xlu0 16
        %1395 = vperm.xlu0 %1394, %v968
        %v1396 = vpop.permute.xlu0 %1395
        %1398 = vset.pattern.permute.xlu0 16
        %1399 = vperm.xlu0 %1398, %v969
        %v1400 = vpop.permute.xlu0 %1399
        %1402 = vset.pattern.permute.xlu0 16
        %1403 = vperm.xlu0 %1402, %v970
        %v1404 = vpop.permute.xlu0 %1403
        %1406 = vset.pattern.permute.xlu0 16
        %1407 = vperm.xlu0 %1406, %v971
        %v1408 = vpop.permute.xlu0 %1407
        %v1410 = vsel %vm1393, %v1396, 0.0
        %v1411 = vsel %vm1393, %v1400, 0.0
        %v1412 = vsel %vm1393, %v1404, 0.0
        %v1413 = vsel %vm1393, %v1408, 0.0
        %v1414 = vadd.f32 %v1388, %v1410
        %v1415 = vadd.f32 %v1389, %v1411
        %v1416 = vadd.f32 %v1390, %v1412
        %v1417 = vadd.f32 %v1391, %v1413
        %v1418 = vperm.slane %v885, 1
        %vm1419 = vcmp.eq.s32.totalorder %v1418, 1
        %1420 = vset.pattern.permute.xlu0 17
        %1421 = vperm.xlu0 %1420, %v968
        %v1422 = vpop.permute.xlu0 %1421
        %1424 = vset.pattern.permute.xlu0 17
        %1425 = vperm.xlu0 %1424, %v969
        %v1426 = vpop.permute.xlu0 %1425
        %1428 = vset.pattern.permute.xlu0 17
        %1429 = vperm.xlu0 %1428, %v970
        %v1430 = vpop.permute.xlu0 %1429
        %1432 = vset.pattern.permute.xlu0 17
        %1433 = vperm.xlu0 %1432, %v971
        %v1434 = vpop.permute.xlu0 %1433
        %v1436 = vsel %vm1419, %v1422, 0.0
        %v1437 = vsel %vm1419, %v1426, 0.0
        %v1438 = vsel %vm1419, %v1430, 0.0
        %v1439 = vsel %vm1419, %v1434, 0.0
        %v1440 = vadd.f32 %v1414, %v1436
        %v1441 = vadd.f32 %v1415, %v1437
        %v1442 = vadd.f32 %v1416, %v1438
        %v1443 = vadd.f32 %v1417, %v1439
        %v1444 = vperm.slane %v913, 1
        %vm1445 = vcmp.eq.s32.totalorder %v1444, 1
        %1446 = vset.pattern.permute.xlu0 18
        %1447 = vperm.xlu0 %1446, %v968
        %v1448 = vpop.permute.xlu0 %1447
        %1450 = vset.pattern.permute.xlu0 18
        %1451 = vperm.xlu0 %1450, %v969
        %v1452 = vpop.permute.xlu0 %1451
        %1454 = vset.pattern.permute.xlu0 18
        %1455 = vperm.xlu0 %1454, %v970
        %v1456 = vpop.permute.xlu0 %1455
        %1458 = vset.pattern.permute.xlu0 18
        %1459 = vperm.xlu0 %1458, %v971
        %v1460 = vpop.permute.xlu0 %1459
        %v1462 = vsel %vm1445, %v1448, 0.0
        %v1463 = vsel %vm1445, %v1452, 0.0
        %v1464 = vsel %vm1445, %v1456, 0.0
        %v1465 = vsel %vm1445, %v1460, 0.0
        %v1466 = vadd.f32 %v1440, %v1462
        %v1467 = vadd.f32 %v1441, %v1463
        %v1468 = vadd.f32 %v1442, %v1464
        %v1469 = vadd.f32 %v1443, %v1465
        %v1470 = vperm.slane %v941, 1
        %vm1471 = vcmp.eq.s32.totalorder %v1470, 1
        %1472 = vset.pattern.permute.xlu0 19
        %1473 = vperm.xlu0 %1472, %v968
        %v1474 = vpop.permute.xlu0 %1473
        %1476 = vset.pattern.permute.xlu0 19
        %1477 = vperm.xlu0 %1476, %v969
        %v1478 = vpop.permute.xlu0 %1477
        %1480 = vset.pattern.permute.xlu0 19
        %1481 = vperm.xlu0 %1480, %v970
        %v1482 = vpop.permute.xlu0 %1481
        %1484 = vset.pattern.permute.xlu0 19
        %1485 = vperm.xlu0 %1484, %v971
        %v1486 = vpop.permute.xlu0 %1485
        %v1488 = vsel %vm1471, %v1474, 0.0
        %v1489 = vsel %vm1471, %v1478, 0.0
        %v1490 = vsel %vm1471, %v1482, 0.0
        %v1491 = vsel %vm1471, %v1486, 0.0
        %v1492 = vadd.f32 %v1466, %v1488
        %v1493 = vadd.f32 %v1467, %v1489
        %v1494 = vadd.f32 %v1468, %v1490
        %v1495 = vadd.f32 %v1469, %v1491
        %vm1496 = vcmp.eq.s32.totalorder %v399, 20
        %v1497 = vsel %vm1496, 1, 0
        %v1498 = vperm.slane %v1497, 1
        %vm1499 = vcmp.eq.s32.totalorder %v1498, 1
        %1500 = vset.pattern.permute.xlu0 20
        %1501 = vperm.xlu0 %1500, %v968
        %v1502 = vpop.permute.xlu0 %1501
        %1504 = vset.pattern.permute.xlu0 20
        %1505 = vperm.xlu0 %1504, %v969
        %v1506 = vpop.permute.xlu0 %1505
        %1508 = vset.pattern.permute.xlu0 20
        %1509 = vperm.xlu0 %1508, %v970
        %v1510 = vpop.permute.xlu0 %1509
        %1512 = vset.pattern.permute.xlu0 20
        %1513 = vperm.xlu0 %1512, %v971
        %v1514 = vpop.permute.xlu0 %1513
        %v1516 = vsel %vm1499, %v1502, 0.0
        %v1517 = vsel %vm1499, %v1506, 0.0
        %v1518 = vsel %vm1499, %v1510, 0.0
        %v1519 = vsel %vm1499, %v1514, 0.0
        %v1520 = vadd.f32 %v1492, %v1516
        %v1521 = vadd.f32 %v1493, %v1517
        %v1522 = vadd.f32 %v1494, %v1518
        %v1523 = vadd.f32 %v1495, %v1519
        %vm1524 = vcmp.eq.s32.totalorder %v399, 21
        %v1525 = vsel %vm1524, 1, 0
        %v1526 = vperm.slane %v1525, 1
        %vm1527 = vcmp.eq.s32.totalorder %v1526, 1
        %1528 = vset.pattern.permute.xlu0 21
        %1529 = vperm.xlu0 %1528, %v968
        %v1530 = vpop.permute.xlu0 %1529
        %1532 = vset.pattern.permute.xlu0 21
        %1533 = vperm.xlu0 %1532, %v969
        %v1534 = vpop.permute.xlu0 %1533
        %1536 = vset.pattern.permute.xlu0 21
        %1537 = vperm.xlu0 %1536, %v970
        %v1538 = vpop.permute.xlu0 %1537
        %1540 = vset.pattern.permute.xlu0 21
        %1541 = vperm.xlu0 %1540, %v971
        %v1542 = vpop.permute.xlu0 %1541
        %v1544 = vsel %vm1527, %v1530, 0.0
        %v1545 = vsel %vm1527, %v1534, 0.0
        %v1546 = vsel %vm1527, %v1538, 0.0
        %v1547 = vsel %vm1527, %v1542, 0.0
        %v1548 = vadd.f32 %v1520, %v1544
        %v1549 = vadd.f32 %v1521, %v1545
        %v1550 = vadd.f32 %v1522, %v1546
        %v1551 = vadd.f32 %v1523, %v1547
        %vm1552 = vcmp.eq.s32.totalorder %v399, 22
        %v1553 = vsel %vm1552, 1, 0
        %v1554 = vperm.slane %v1553, 1
        %vm1555 = vcmp.eq.s32.totalorder %v1554, 1
        %1556 = vset.pattern.permute.xlu0 22
        %1557 = vperm.xlu0 %1556, %v968
        %v1558 = vpop.permute.xlu0 %1557
        %1560 = vset.pattern.permute.xlu0 22
        %1561 = vperm.xlu0 %1560, %v969
        %v1562 = vpop.permute.xlu0 %1561
        %1564 = vset.pattern.permute.xlu0 22
        %1565 = vperm.xlu0 %1564, %v970
        %v1566 = vpop.permute.xlu0 %1565
        %1568 = vset.pattern.permute.xlu0 22
        %1569 = vperm.xlu0 %1568, %v971
        %v1570 = vpop.permute.xlu0 %1569
        %v1572 = vsel %vm1555, %v1558, 0.0
        %v1573 = vsel %vm1555, %v1562, 0.0
        %v1574 = vsel %vm1555, %v1566, 0.0
        %v1575 = vsel %vm1555, %v1570, 0.0
        %v1576 = vadd.f32 %v1548, %v1572
        %v1577 = vadd.f32 %v1549, %v1573
        %v1578 = vadd.f32 %v1550, %v1574
        %v1579 = vadd.f32 %v1551, %v1575
        %vm1580 = vcmp.eq.s32.totalorder %v399, 23
        %v1581 = vsel %vm1580, 1, 0
        %v1582 = vperm.slane %v1581, 1
        %vm1583 = vcmp.eq.s32.totalorder %v1582, 1
        %1584 = vset.pattern.permute.xlu0 23
        %1585 = vperm.xlu0 %1584, %v968
        %v1586 = vpop.permute.xlu0 %1585
        %1588 = vset.pattern.permute.xlu0 23
        %1589 = vperm.xlu0 %1588, %v969
        %v1590 = vpop.permute.xlu0 %1589
        %1592 = vset.pattern.permute.xlu0 23
        %1593 = vperm.xlu0 %1592, %v970
        %v1594 = vpop.permute.xlu0 %1593
        %1596 = vset.pattern.permute.xlu0 23
        %1597 = vperm.xlu0 %1596, %v971
        %v1598 = vpop.permute.xlu0 %1597
        %v1600 = vsel %vm1583, %v1586, 0.0
        %v1601 = vsel %vm1583, %v1590, 0.0
        %v1602 = vsel %vm1583, %v1594, 0.0
        %v1603 = vsel %vm1583, %v1598, 0.0
        %v1604 = vadd.f32 %v1576, %v1600
        %v1605 = vadd.f32 %v1577, %v1601
        %v1606 = vadd.f32 %v1578, %v1602
        %v1607 = vadd.f32 %v1579, %v1603
        %1608 = vst [vmem:[%s387] sm:$0xff] %v964
        %1609 = vst [vmem:[%s387 + $0x8] sm:$0xff] %v965
        %1610 = vst [vmem:[%s387 + $0x10] sm:$0xff] %v966
        %1611 = vst [vmem:[%s387 + $0x18] sm:$0xff] %v967
        %1612 = vst [vmem:[%s394] sm:$0xff] %v1604
        %1613 = vst [vmem:[%s394 + $0x8] sm:$0xff] %v1605
        %1614 = vst [vmem:[%s394 + $0x10] sm:$0xff] %v1606
        %1615 = vst [vmem:[%s394 + $0x18] sm:$0xff] %v1607
        %v1616 = vld [vmem:[%s3] sm:$0xff]
        %v1617 = vld [vmem:[%s3 + $0x8] sm:$0xff]
        %v1618 = vld [vmem:[%s3 + $0x10] sm:$0xff]
        %v1619 = vld [vmem:[%s3 + $0x18] sm:$0xff]
        %v1620 = vld [vmem:[%s4] sm:$0xff]
        %v1621 = vld [vmem:[%s4 + $0x8] sm:$0xff]
        %v1622 = vld [vmem:[%s4 + $0x10] sm:$0xff]
        %v1623 = vld [vmem:[%s4 + $0x18] sm:$0xff]
        %vm1624 = vcmask 261120
        %v1626 = vsel %vm1624, %v1620, 0
        %v1629 = vsel %vm1624, %v1621, 0
        %v1632 = vsel %vm1624, %v1622, 0
        %v1635 = vsel %vm1624, %v1623, 0
        %1637 = vmatpush.msra.mxu0 0.0
        %1638 = vmatpush.msra.mxu0 0.0
        %1639 = vmatpush.msra.mxu0 0.0
        %1640 = vmatpush.msra.mxu0 0.0
        %1641 = vmatpush.msra.mxu0 0.0
        %1642 = vmatpush.msra.mxu0 0.0
        %1643 = vmatpush.msra.mxu0 0.0
        %1644 = vmatpush.msra.mxu0 0.0
        %1645 = vmatpush.msra.mxu0 0.0
        %1646 = vmatpush.msra.mxu0 0.0
        %1647 = vmatpush.msra.mxu0 0.0
        %1648 = vmatpush.msra.mxu0 0.0
        %1649 = vmatpush.msra.mxu0 %v1607
        %1650 = vmatpush.msra.mxu0 %v1606
        %1651 = vmatpush.msra.mxu0 %v1605
        %1652 = vmatpush.msra.mxu0 %v1604
        %1653 = vmatmul.f32.gmra.mxu0 %v1626
        %v1654 = vpop.f32.mrf.mxu0
        %v1655 = vadd.f32 0.0, %v1654
        %1656 = vmatmul.f32.gmra.mxu0 %v1629
        %v1657 = vpop.f32.mrf.mxu0
        %v1658 = vadd.f32 0.0, %v1657
        %1659 = vmatmul.f32.gmra.mxu0 %v1632
        %v1660 = vpop.f32.mrf.mxu0
        %v1661 = vadd.f32 0.0, %v1660
        %1662 = vmatmul.f32.gmra.mxu0 %v1635
        %v1663 = vpop.f32.mrf.mxu0
        %v1664 = vadd.f32 0.0, %v1663
        %1665 = vdwg.mxu0
        %v1667 = vsel %vm1624, %v1616, 0
        %v1670 = vsel %vm1624, %v1617, 0
        %v1673 = vsel %vm1624, %v1618, 0
        %v1676 = vsel %vm1624, %v1619, 0
        %1678 = vmatpush.msra.mxu0 0.0
        %1679 = vmatpush.msra.mxu0 0.0
        %1680 = vmatpush.msra.mxu0 0.0
        %1681 = vmatpush.msra.mxu0 0.0
        %1682 = vmatpush.msra.mxu0 0.0
        %1683 = vmatpush.msra.mxu0 0.0
        %1684 = vmatpush.msra.mxu0 0.0
        %1685 = vmatpush.msra.mxu0 0.0
        %1686 = vmatpush.msra.mxu0 0.0
        %1687 = vmatpush.msra.mxu0 0.0
        %1688 = vmatpush.msra.mxu0 0.0
        %1689 = vmatpush.msra.mxu0 0.0
        %1690 = vmatpush.msra.mxu0 %v967
        %1691 = vmatpush.msra.mxu0 %v966
        %1692 = vmatpush.msra.mxu0 %v965
        %1693 = vmatpush.msra.mxu0 %v964
        %1694 = vmatmul.f32.gmra.mxu0 %v1667
        %v1695 = vpop.f32.mrf.mxu0
        %v1696 = vadd.f32 %v1655, %v1695
        %1697 = vmatmul.f32.gmra.mxu0 %v1670
        %v1698 = vpop.f32.mrf.mxu0
        %v1699 = vadd.f32 %v1658, %v1698
        %1700 = vmatmul.f32.gmra.mxu0 %v1673
        %v1701 = vpop.f32.mrf.mxu0
        %v1702 = vadd.f32 %v1661, %v1701
        %1703 = vmatmul.f32.gmra.mxu0 %v1676
        %v1704 = vpop.f32.mrf.mxu0
        %v1705 = vadd.f32 %v1664, %v1704
        %1706 = vdwg.mxu0
        %v1707 = vld [vmem:[%s5] sm:$0xff]
        %v1708 = vld [vmem:[%s5 + $0x8] sm:$0xff]
        %v1709 = vld [vmem:[%s5 + $0x10] sm:$0xff]
        %v1710 = vld [vmem:[%s5 + $0x18] sm:$0xff]
        %1712 = vset.pattern.permute.xlu0 0
        %1713 = vperm.xlu0 %1712, %v1707
        %v1714 = vpop.permute.xlu0 %1713
        %1717 = vset.pattern.permute.xlu0 0
        %1718 = vperm.xlu0 %1717, %v1708
        %v1719 = vpop.permute.xlu0 %1718
        %1722 = vset.pattern.permute.xlu0 0
        %1723 = vperm.xlu0 %1722, %v1709
        %v1724 = vpop.permute.xlu0 %1723
        %1727 = vset.pattern.permute.xlu0 0
        %1728 = vperm.xlu0 %1727, %v1710
        %v1729 = vpop.permute.xlu0 %1728
        %v1731 = vadd.f32 %v1696, %v1714
        %v1732 = vadd.f32 %v1699, %v1719
        %v1733 = vadd.f32 %v1702, %v1724
        %v1734 = vadd.f32 %v1705, %v1729
        %v1735 = vmax.f32 %v1731, 0.0
        %v1736 = vmax.f32 %v1732, 0.0
        %v1737 = vmax.f32 %v1733, 0.0
        %v1738 = vmax.f32 %v1734, 0.0
        %v1739 = vld [vmem:[%s6] sm:$0xff]
        %v1740 = vld [vmem:[%s6 + $0x8] sm:$0xff]
        %v1741 = vld [vmem:[%s7] sm:$0xff]
        %v1742 = vld [vmem:[%s7 + $0x8] sm:$0xff]
        %1744 = vset.pattern.permute.xlu0 0
        %1745 = vperm.xlu0 %1744, %v1741
        %v1746 = vpop.permute.xlu0 %1745
        %1749 = vset.pattern.permute.xlu0 0
        %1750 = vperm.xlu0 %1749, %v1742
        %v1751 = vpop.permute.xlu0 %1750
        %v1754 = vsel %vm1624, %v1739, 0
        %v1757 = vsel %vm1624, %v1740, 0
        %1759 = vmatpush.msra.mxu0 0.0
        %1760 = vmatpush.msra.mxu0 0.0
        %1761 = vmatpush.msra.mxu0 0.0
        %1762 = vmatpush.msra.mxu0 0.0
        %1763 = vmatpush.msra.mxu0 0.0
        %1764 = vmatpush.msra.mxu0 0.0
        %1765 = vmatpush.msra.mxu0 0.0
        %1766 = vmatpush.msra.mxu0 0.0
        %1767 = vmatpush.msra.mxu0 0.0
        %1768 = vmatpush.msra.mxu0 0.0
        %1769 = vmatpush.msra.mxu0 0.0
        %1770 = vmatpush.msra.mxu0 0.0
        %1771 = vmatpush.msra.mxu0 %v1738
        %1772 = vmatpush.msra.mxu0 %v1737
        %1773 = vmatpush.msra.mxu0 %v1736
        %1774 = vmatpush.msra.mxu0 %v1735
        %1775 = vmatmul.f32.gmra.mxu0 %v1754
        %v1776 = vpop.f32.mrf.mxu0
        %v1777 = vadd.f32 %v1746, %v1776
        %1778 = vmatmul.f32.gmra.mxu0 %v1757
        %v1779 = vpop.f32.mrf.mxu0
        %v1780 = vadd.f32 %v1751, %v1779
        %1781 = vdwg.mxu0
        %v1782 = vmax.f32 %v1777, 0.0
        %v1783 = vmax.f32 %v1780, 0.0
        %v1784 = vld [vmem:[%s8] sm:$0xff]
        %v1785 = vld [vmem:[%s8 + $0x8] sm:$0xff]
        %1787 = vset.pattern.permute.xlu0 0
        %1788 = vperm.xlu0 %1787, %v1784
        %v1789 = vpop.permute.xlu0 %1788
        %1792 = vset.pattern.permute.xlu0 0
        %1793 = vperm.xlu0 %1792, %v1785
        %v1794 = vpop.permute.xlu0 %1793
        %v1796 = vmul.f32 %v1782, %v1789
        %v1797 = vmul.f32 %v1783, %v1794
        %v1798 = vadd.f32 %v1796, %v1797
        %v1799 = vrot.slane %v1798, 4
        %v1800 = vadd.f32 %v1798, %v1799
        %v1801 = vrot.slane %v1800, 2
        %v1802 = vadd.f32 %v1800, %v1801
        %v1803 = vrot.slane %v1802, 1
        %v1804 = vadd.f32 %v1802, %v1803
        %1805 = vst [vmem:[%s380] sm:$0x1] %v1804
        %s1806 = sand.u32 %s231, 1
        %s1807 = scalar_lea.sflag [#allocation3], %s1806
        %s1808 = sand.u32 %s231, 1
        %s1809 = scalar_lea.vmem [#allocation2], %s1808
        %s1810 = sand.u32 %s29, 1
        %s1811 = scalar_lea.sflag [#allocation5], %s1810
        %s1812 = sand.u32 %s257, 1
        %s1813 = smul.addr %s1812, 32
        %s1814 = scalar_lea.vmem [#allocation4], %s1813
        %s1815 = sand.u32 %s29, 1
        %s1816 = scalar_lea.sflag [#allocation5], %s1815
        %s1817 = sand.u32 %s283, 1
        %s1818 = smul.addr %s1817, 32
        %s1819 = scalar_lea.vmem [#allocation6], %s1818
        // Predicated region
        $region57: #{tpu_custom_call.1} parent=55 // pred_check
          %p1820 = pneg %p241
        $region58: #{tpu_custom_call.1} parent=55 // pred_check_branch
          %1822 = sbr.rel (%p1820) target = $region60
        $region59: #{tpu_custom_call.1} parent=55 // pred_region
          %1824 = vsyncadd %s1807, 0
          %s1825 = scalar_lea.hbm %s9, %s29
          %s1827 = sshll.u32 %s1809, 4
          %s1828 = int_to_ptr.vmem [resolvable:$true] %s1827
          %s1829 = sshll.u32 %s1825, 4
          %s1830 = int_to_ptr.hbm [resolvable:$true] %s1829
          %1832 = dma.vmem_to_hbm [thread:$0]  %s1828, 16, %s1830, %s1807
        $region60: #{tpu_custom_call.1} parent=55 // pred_fallthru
          _
        // Predicated region
        $region61: #{tpu_custom_call.1} parent=55 // pred_check
          %p1833 = pneg %p267
        $region62: #{tpu_custom_call.1} parent=55 // pred_check_branch
          %1835 = sbr.rel (%p1833) target = $region64
        $region63: #{tpu_custom_call.1} parent=55 // pred_region
          %1837 = vsyncadd %s1811, 0
          %s1838 = smul.addr %s29, 8
          %s1839 = scalar_lea.hbm %s10, %s1838
          %s1840 = sshll.u32 %s1814, 4
          %s1841 = int_to_ptr.vmem [resolvable:$true] %s1840
          %s1842 = sshll.u32 %s1839, 4
          %s1843 = int_to_ptr.hbm [resolvable:$true] %s1842
          %1848 = dma.vmem_to_hbm [thread:$0]  %s1841, 512, %s1843, %s1811, 128, 256, 8
        $region64: #{tpu_custom_call.1} parent=55 // pred_fallthru
          _
        // Predicated region
        $region65: #{tpu_custom_call.1} parent=55 // pred_check
          %p1849 = pneg %p293
        $region66: #{tpu_custom_call.1} parent=55 // pred_check_branch
          %1851 = sbr.rel (%p1849) target = $region68
        $region67: #{tpu_custom_call.1} parent=55 // pred_region
          %1853 = vsyncadd %s1816, 0
          %s1854 = smul.addr %s29, 8
          %s1855 = scalar_lea.hbm %s11, %s1854
          %s1856 = sshll.u32 %s1819, 4
          %s1857 = int_to_ptr.vmem [resolvable:$true] %s1856
          %s1858 = sshll.u32 %s1855, 4
          %s1859 = int_to_ptr.hbm [resolvable:$true] %s1858
          %1864 = dma.vmem_to_hbm [thread:$0]  %s1857, 512, %s1859, %s1816, 128, 256, 8
        $region68: #{tpu_custom_call.1} parent=55 // pred_fallthru
          _
      $region56: #{tpu_custom_call.1} parent=5 // pred_fallthru
        _
      %p1865 = scmp.le.s32.totalorder 2, %s24
      // Predicated region
      $region69: #{tpu_custom_call.1} parent=5 // pred_check
        %p1866 = pneg %p1865
      $region70: #{tpu_custom_call.1} parent=5 // pred_check_branch
        %1868 = sbr.rel (%p1866) target = $region72
      $region71: #{tpu_custom_call.1} parent=5 // pred_region
        %s1869 = ssub.s32 %s24, 2
        // Predicated region
        $region73: #{tpu_custom_call.1} parent=71 // pred_check
          %p1870 = pneg %p247
        $region74: #{tpu_custom_call.1} parent=71 // pred_check_branch
          %1872 = sbr.rel (%p1870) target = $region76
        $region75: #{tpu_custom_call.1} parent=71 // pred_region
          %s1873 = sand.u32 %s232, 1
          %s1874 = scalar_lea.sflag [#allocation3], %s1873
          %s1875 = sand.u32 %s232, 1
          %s1876 = scalar_lea.vmem [#allocation2], %s1875
          %1878 = dma.done %s1874, 16
        $region76: #{tpu_custom_call.1} parent=71 // pred_fallthru
          _
        // Predicated region
        $region77: #{tpu_custom_call.1} parent=71 // pred_check
          %p1879 = pneg %p273
        $region78: #{tpu_custom_call.1} parent=71 // pred_check_branch
          %1881 = sbr.rel (%p1879) target = $region80
        $region79: #{tpu_custom_call.1} parent=71 // pred_region
          %s1882 = sand.u32 %s30, 1
          %s1883 = scalar_lea.sflag [#allocation5], %s1882
          %s1884 = sand.u32 %s258, 1
          %s1885 = smul.addr %s1884, 32
          %s1886 = scalar_lea.vmem [#allocation4], %s1885
          %1888 = dma.done %s1883, 512
        $region80: #{tpu_custom_call.1} parent=71 // pred_fallthru
          _
        // Predicated region
        $region81: #{tpu_custom_call.1} parent=71 // pred_check
          %p1889 = pneg %p299
        $region82: #{tpu_custom_call.1} parent=71 // pred_check_branch
          %1891 = sbr.rel (%p1889) target = $region84
        $region83: #{tpu_custom_call.1} parent=71 // pred_region
          %s1892 = sand.u32 %s30, 1
          %s1893 = scalar_lea.sflag [#allocation5], %s1892
          %s1894 = sand.u32 %s284, 1
          %s1895 = smul.addr %s1894, 32
          %s1896 = scalar_lea.vmem [#allocation6], %s1895
          %1898 = dma.done %s1893, 512
        $region84: #{tpu_custom_call.1} parent=71 // pred_fallthru
          _
      $region72: #{tpu_custom_call.1} parent=5 // pred_fallthru
        _
    $region6: #{tpu_custom_call.1} parent=1 // loop_footer
      %s28 = sadd.s32 1, %s24
    $region7: #{tpu_custom_call.1} parent=1 // loop_footer_branch
      %23 = sbr.rel target = $region3
    $region8: #{tpu_custom_call.1} parent=1 // loop_exit
      _
    %1899 = vsyncpa [#allocation3], 1
    %s1900 = scalar_lea.sflag [#allocation3], 1
    %1901 = vsyncpa %s1900, 1
    %1902 = vsyncpa [#allocation5], 1
    %s1903 = scalar_lea.sflag [#allocation5], 1
    %1904 = vsyncpa %s1903, 1

</llo_original>
